<compile_context>
chip_gen: v6e
topology: v6e:2x2x1
jax: 0.10.0
libtpu: 0.0.40
codegen_flags: <defaults>
</compile_context>

<pallas_src>
import functools

import jax
import jax.numpy as jnp
from jax.experimental import pallas as pl
from jax.experimental.pallas import tpu as pltpu

BN_EPS = 1e-5
TM = 256      # node-row tile (multiple of 256 -> MXU-friendly on v5e/v6e/v7x)
LANE = 128    # feature padding granularity (TPU lane width)


def _round_up(x, m):
    return ((x + m - 1) // m) * m


def _physical_vmem_bytes():
    """Best-effort physical VMEM capacity query with a conservative fallback."""
    try:
        info = pltpu.get_tpu_info()
        for attr in ("vmem_capacity_bytes", "vmem_size_bytes", "vmem_bytes"):
            v = getattr(info, attr, None)
            if v:
                return int(v)
    except Exception:
        pass
    return 64 * 1024 * 1024   # conservative v7x-sized default


def _choose_adj_plan(n_pad, f_pad, budget):
    """Pick whole-adjacency VMEM residency vs streamed (TM, TK) tiles."""
    fixed = (2 * n_pad * f_pad * 2            # bf16 feature ping-pong scratch
             + TM * f_pad * 4                 # f32 aggregation accumulator
             + 2 * TM * f_pad * 4             # double-buffered f32 output block
             + 2 * (2 * f_pad * f_pad * 2)    # double-buffered bf16 w1/w2
             + 2 * (2 * f_pad * 4)            # double-buffered f32 b1/b2
             + (2 << 20))                     # compiler / DMA slack
    remaining = budget - fixed
    adj_full = n_pad * n_pad * 2              # bf16
    if adj_full <= remaining:
        return True, n_pad                    # resident: k axis collapses to 1
    for tk in (2048, 1024, 512, 256):
        if n_pad % tk == 0 and 3 * TM * tk * 2 <= remaining:
            return False, tk
    return False, 256


def _fused_gin_kernel(adj_ref, x0_ref, w1_ref, b1_ref, w2_ref, b2_ref,
                      o_ref, feat_ref, acc_ref, seed_sem, *extra_scratch,
                      last_activation, adj_resident, tm, tk):
    l = pl.program_id(0)            # layer
    m = pl.program_id(1)            # node-row tile
    k = pl.program_id(2)            # aggregation reduction tile
    num_layers = pl.num_programs(0)
    num_k = pl.num_programs(2)

    adj_vmem = extra_scratch[0] if adj_resident else None

    # One-time seeding: DMA the padded bf16 input features (and, in the
    # resident plan, the whole bf16 adjacency) from HBM into VMEM scratch.
    # Both carry memory_space=pl.ANY, so they cost no pipelined VMEM buffers.
    @pl.when((l == 0) & (m == 0) & (k == 0))
    def _():
        x_cp = pltpu.make_async_copy(x0_ref, feat_ref.at[0], seed_sem.at[0])
        x_cp.start()
        if adj_resident:
            a_cp = pltpu.make_async_copy(adj_ref, adj_vmem, seed_sem.at[1])
            a_cp.start()
            a_cp.wait()
        x_cp.wait()

    # f32 accumulator for the aggregation, reset at the start of each K sweep.
    @pl.when(k == 0)
    def _():
        acc_ref[...] = jnp.zeros_like(acc_ref)

    cur = jax.lax.rem(l, 2)         # scratch slot holding this layer's input

    # --- GINConv aggregation: (A + I) @ x, bf16 operands, f32 accumulation ---
    k_start = pl.multiple_of(k * tk, tk)
    x_blk = feat_ref[cur, pl.ds(k_start, tk), :]              # bf16 (tk, f_pad)
    if adj_resident:
        m_start = pl.multiple_of(m * tm, tm)
        adj_blk = adj_vmem[pl.ds(m_start, tm), :]             # bf16 (tm, n_pad)
    else:
        adj_blk = adj_ref[...]                                # bf16 (tm, tk)
    acc_ref[...] += jnp.dot(adj_blk, x_blk, preferred_element_type=jnp.float32)

    # --- MLP + activation, once per (layer, row-tile) ---
    @pl.when(k == num_k - 1)
    def _():
        h = acc_ref[...].astype(jnp.bfloat16)
        # Linear1 with eval-mode BatchNorm pre-folded into (w1, b1), then ReLU.
        z = jnp.dot(h, w1_ref[0], preferred_element_type=jnp.float32) + b1_ref[0]
        z = jnp.maximum(z, 0.0)
        # Linear2.
        z2 = jnp.dot(z.astype(jnp.bfloat16), w2_ref[0],
                     preferred_element_type=jnp.float32) + b2_ref[0]
        z2_act = jnp.maximum(z2, 0.0)

        # Next layer always consumes the ReLU'd features
        # (norm='id', dropout=identity in eval mode).
        nxt = 1 - cur
        m_start = pl.multiple_of(m * tm, tm)
        feat_ref[nxt, pl.ds(m_start, tm), :] = z2_act.astype(jnp.bfloat16)

        # Only the last layer produces real output; the out index_map parks all
        # non-final layers on block (0, 0), so HBM sees exactly one output pass.
        @pl.when(l == num_layers - 1)
        def _():
            out_val = z2_act if last_activation else z2
            o_ref[...] = out_val.astype(o_ref.dtype)


def _fold_and_pad_params(params, f_pad):
    """Fold eval-mode BatchNorm into Linear1; pad dims to f_pad; bf16 weights."""
    w1s, b1s, w2s, b2s = [], [], [], []
    for (w1, b1, gamma, beta, rmean, rvar, w2, b2) in params:
        scale = gamma / jnp.sqrt(rvar + BN_EPS)              # (1, d_hid)
        w1f = w1 * scale                                     # (d_in, d_hid)
        b1f = (b1 - rmean) * scale + beta                    # (1, d_hid)
        d_in, d_hid = w1.shape
        d_out = w2.shape[1]
        w1s.append(jnp.zeros((f_pad, f_pad), jnp.bfloat16)
                   .at[:d_in, :d_hid].set(w1f.astype(jnp.bfloat16)))
        b1s.append(jnp.zeros((1, f_pad), jnp.float32).at[:, :d_hid].set(b1f))
        w2s.append(jnp.zeros((f_pad, f_pad), jnp.bfloat16)
                   .at[:d_hid, :d_out].set(w2.astype(jnp.bfloat16)))
        b2s.append(jnp.zeros((1, f_pad), jnp.float32).at[:, :d_out].set(b2))
    return (jnp.stack(w1s), jnp.stack(b1s), jnp.stack(w2s), jnp.stack(b2s))


def gin_encoder_forward(x, edge_index, params, last_activation=True):
    """Forward pass of GIN_Encoder (norm='id', activation='relu', eval-mode)."""
    n, input_dim = x.shape
    num_layers = len(params)
    output_dim = params[-1][6].shape[1]

    # Lane-dense feature padding (all per-layer dims share one padded width).
    dims = [input_dim]
    for (w1, _, _, _, _, _, w2, _) in params:
        dims += [w1.shape[0], w1.shape[1], w2.shape[1]]
    f_pad = _round_up(max(dims), LANE)
    n_pad = _round_up(max(n, TM), TM)

    # Dense adjacency A[i, j] = #edges (j -> i) with the GIN self-loop (eps=0)
    # folded in, built directly in bf16 (small integer counts are exact) so the
    # full f32 n_pad^2 array is never materialized host-side.
    src, dst = edge_index[0], edge_index[1]
    self_idx = jnp.arange(n, dtype=src.dtype)
    rows = jnp.concatenate([dst, self_idx])
    cols = jnp.concatenate([src, self_idx])
    adj = jnp.zeros((n_pad, n_pad), jnp.bfloat16).at[rows, cols].add(
        jnp.ones((rows.shape[0],), jnp.bfloat16))

    x_pad = jnp.zeros((n_pad, f_pad), jnp.bfloat16).at[:n, :input_dim].set(
        x.astype(jnp.bfloat16))

    w1s, b1s, w2s, b2s = _fold_and_pad_params(params, f_pad)

    # Generation-aware VMEM budget and adjacency plan.
    vmem_cap = _physical_vmem_bytes()
    budget = (vmem_cap * 3) // 4
    adj_resident, tk = _choose_adj_plan(n_pad, f_pad, budget)
    num_k = 1 if adj_resident else n_pad // tk
    grid = (num_layers, n_pad // TM, num_k)

    if adj_resident:
        # Whole adjacency DMA'd once into VMEM scratch (single copy, no
        # per-layer HBM re-streaming); k axis collapses to a single step.
        adj_spec = pl.BlockSpec(memory_space=pl.ANY)
        extra_scratch = [pltpu.VMEM((n_pad, n_pad), jnp.bfloat16)]
    else:
        # Streamed bf16 adjacency tiles, triple-buffered to hide DMA latency
        # behind the (short, bf16-rate) per-step matmul.
        adj_spec = pl.BlockSpec((TM, tk), lambda l, m, k: (m, k),
                                pipeline_mode=pl.Buffered(3))
        extra_scratch = []

    nl = num_layers
    out_spec = pl.BlockSpec(
        (TM, f_pad),
        # Non-final layers are parked on block (0, 0) (never flushed until the
        # last layer rewrites it), so the output is written to HBM exactly once.
        lambda l, m, k: (jnp.where(l == nl - 1, m, 0), 0))

    kernel = functools.partial(
        _fused_gin_kernel,
        last_activation=last_activation,
        adj_resident=adj_resident,
        tm=TM,
        tk=(n_pad if adj_resident else tk))

    out = pl.pallas_call(
        kernel,
        out_shape=jax.ShapeDtypeStruct((n_pad, f_pad), jnp.float32),
        grid_spec=pltpu.PrefetchScalarGridSpec(
            num_scalar_prefetch=0,
            grid=grid,
            in_specs=[
                adj_spec,
                # padded bf16 input features: raw HBM ref, DMA'd once to scratch
                pl.BlockSpec(memory_space=pl.ANY),
                # per-layer weights/biases (BN folded into w1/b1); weights bf16
                pl.BlockSpec((1, f_pad, f_pad), lambda l, m, k: (l, 0, 0)),
                pl.BlockSpec((1, 1, f_pad), lambda l, m, k: (l, 0, 0)),
                pl.BlockSpec((1, f_pad, f_pad), lambda l, m, k: (l, 0, 0)),
                pl.BlockSpec((1, 1, f_pad), lambda l, m, k: (l, 0, 0)),
            ],
            out_specs=out_spec,
            scratch_shapes=[
                pltpu.VMEM((2, n_pad, f_pad), jnp.bfloat16),  # feature ping-pong
                pltpu.VMEM((TM, f_pad), jnp.float32),         # aggregation acc
                pltpu.SemaphoreType.DMA((2,)),                # seed-copy sems
            ] + extra_scratch,
        ),
        compiler_params=pltpu.CompilerParams(
            # Layer fusion keeps cross-tile state in VMEM scratch, so every
            # grid axis must run in order on a single core.
            dimension_semantics=("arbitrary", "arbitrary", "arbitrary"),
            # ~96 MiB on 128-MiB chips (v5e/v6e), ~48 MiB on v7x (64 MiB).
            vmem_limit_bytes=int(budget),
        ),
    )(adj, x_pad, w1s, b1s, w2s, b2s)

    return out[:n, :output_dim]


def make_params(key, input_dim, layer_num, hidden_size, output_dim):
    """Deterministic parameter init mirroring GIN_Encoder.__init__ shapes."""
    params = []
    dims = []
    if layer_num > 1:
        dims.append((input_dim, hidden_size, hidden_size))
        for _ in range(layer_num - 2):
            dims.append((hidden_size, hidden_size, hidden_size))
        dims.append((hidden_size, hidden_size, output_dim))
    else:
        dims.append((input_dim, hidden_size, hidden_size))

    for (d_in, d_hid, d_out) in dims:
        key, k1, k2, k3, k4 = jax.random.split(key, 5)
        w1 = jax.random.normal(k1, (d_in, d_hid), jnp.float32) * 0.1
        b1 = jax.random.normal(k2, (1, d_hid), jnp.float32) * 0.1
        # BatchNorm1d default init (eval mode): gamma=1, beta=0, rmean=0, rvar=1
        gamma = jnp.ones((1, d_hid), jnp.float32)
        beta = jnp.zeros((1, d_hid), jnp.float32)
        rmean = jnp.zeros((1, d_hid), jnp.float32)
        rvar = jnp.ones((1, d_hid), jnp.float32)
        w2 = jax.random.normal(k3, (d_hid, d_out), jnp.float32) * 0.1
        b2 = jax.random.normal(k4, (1, d_out), jnp.float32) * 0.1
        params.append((w1, b1, gamma, beta, rmean, rvar, w2, b2))
    return params


def reference_forward(x, edge_index, params, last_activation=True):
    """Pure-JAX f32 reference (true module semantics, un-padded, un-folded)."""
    n = x.shape[0]
    adj = jnp.zeros((n, n), jnp.float32).at[edge_index[1], edge_index[0]].add(1.0)
    adj = adj + jnp.eye(n, dtype=jnp.float32)     # (A + I) @ x == sum_j x_j + x_i
    h = x.astype(jnp.float32)
    num_layers = len(params)
    for i, (w1, b1, gamma, beta, rmean, rvar, w2, b2) in enumerate(params):
        agg = adj @ h
        z = agg @ w1 + b1
        z = (z - rmean) * (gamma / jnp.sqrt(rvar + BN_EPS)) + beta
        z = jnp.maximum(z, 0.0)
        z = z @ w2 + b2
        if last_activation or (i < num_layers - 1):
            z = jnp.maximum(z, 0.0)
        h = z
    return h


def reference_forward_bf16(x, edge_index, params, last_activation=True):
    """Pure-JAX reference mirroring the kernel's bf16-operand/f32-accumulate path."""
    n = x.shape[0]
    self_idx = jnp.arange(n, dtype=edge_index.dtype)
    rows = jnp.concatenate([edge_index[1], self_idx])
    cols = jnp.concatenate([edge_index[0], self_idx])
    adj = jnp.zeros((n, n), jnp.bfloat16).at[rows, cols].add(
        jnp.ones((rows.shape[0],), jnp.bfloat16))
    h = x.astype(jnp.bfloat16)
    num_layers = len(params)
    out = None
    for i, (w1, b1, gamma, beta, rmean, rvar, w2, b2) in enumerate(params):
        scale = gamma / jnp.sqrt(rvar + BN_EPS)
        w1f = (w1 * scale).astype(jnp.bfloat16)
        b1f = (b1 - rmean) * scale + beta
        agg = jnp.dot(adj, h, preferred_element_type=jnp.float32)
        z = jnp.dot(agg.astype(jnp.bfloat16), w1f,
                    preferred_element_type=jnp.float32) + b1f
        z = jnp.maximum(z, 0.0)
        z2 = jnp.dot(z.astype(jnp.bfloat16), w2.astype(jnp.bfloat16),
                     preferred_element_type=jnp.float32) + b2
        z2_act = jnp.maximum(z2, 0.0)
        out = z2_act if (last_activation or i < num_layers - 1) else z2
        h = z2_act.astype(jnp.bfloat16)
    return out


if __name__ == "__main__":
    # Small, deterministic example: 16 nodes, 8 input features, 3 GIN layers,
    # hidden=64, output=48, 40 random directed edges.
    key = jax.random.PRNGKey(0)
    k_x, k_e, k_p = jax.random.split(key, 3)

    N, INPUT_DIM, LAYER_NUM, HIDDEN, OUTPUT = 16, 8, 3, 64, 48
    E = 40

    x = jax.random.normal(k_x, (N, INPUT_DIM), jnp.float32)
    edge_index = jax.random.randint(k_e, (2, E), 0, N, dtype=jnp.int32)
    params = make_params(k_p, INPUT_DIM, LAYER_NUM, HIDDEN, OUTPUT)

    out = gin_encoder_forward(x, edge_index, params, last_activation=True)
    out = jax.block_until_ready(out)
    assert out.shape == (N, OUTPUT), out.shape

    # Tight check against a reference that mirrors the kernel's bf16-operand /
    # f32-accumulate precision (validates aggregation, BN folding, layer order,
    # activation placement).
    ref_bf16 = reference_forward_bf16(x, edge_index, params, last_activation=True)
    err_bf16 = float(jnp.max(jnp.abs(out - ref_bf16)))
    assert jnp.allclose(out, ref_bf16, atol=2e-3, rtol=2e-3), f"mismatch: {err_bf16}"

    # Loose sanity check against the exact f32 module semantics (bf16 MXU
    # operands trade a little precision for native-rate matmuls).
    ref_f32 = reference_forward(x, edge_index, params, last_activation=True)
    rel = float(jnp.linalg.norm(out - ref_f32) /
                (jnp.linalg.norm(ref_f32) + 1e-9))
    assert rel < 0.1, f"relative error vs f32 reference too large: {rel}"

    print("KERNEL_OK")
</pallas_src>

<mosaic_0001>
module attributes {stable_mosaic.version = 11 : i64} {
  func.func @_fused_gin_kernel(%arg0: i32, %arg1: i32, %arg2: i32, %arg3: memref<256x256xbf16, #tpu.memory_space<any>>, %arg4: memref<256x128xbf16, #tpu.memory_space<any>>, %arg5: memref<1x128x128xbf16, #tpu.memory_space<vmem>>, %arg6: memref<1x1x128xf32, #tpu.memory_space<vmem>>, %arg7: memref<1x128x128xbf16, #tpu.memory_space<vmem>>, %arg8: memref<1x1x128xf32, #tpu.memory_space<vmem>>, %arg9: memref<256x128xf32, #tpu.memory_space<vmem>>, %arg10: memref<2x256x128xbf16, #tpu.memory_space<vmem>>, %arg11: memref<256x128xf32, #tpu.memory_space<vmem>>, %arg12: memref<2x!tpu.dma_semaphore, #tpu.memory_space<semaphore_mem>>, %arg13: memref<256x256xbf16, #tpu.memory_space<vmem>>) attributes {dimension_semantics = [#tpu.dimension_semantics<arbitrary>, #tpu.dimension_semantics<arbitrary>, #tpu.dimension_semantics<arbitrary>], iteration_bounds = array<i64: 3, 1, 1>, scalar_prefetch = 0 : i64, scratch_operands = 4 : i64, tpu.core_type = #tpu.core_type<tc>, window_params = [{}, {}, {transform_indices = @transform_2, window_bounds = array<i64: 1, 128, 128>}, {transform_indices = @transform_3, window_bounds = array<i64: 1, 1, 128>}, {transform_indices = @transform_4, window_bounds = array<i64: 1, 128, 128>}, {transform_indices = @transform_5, window_bounds = array<i64: 1, 1, 128>}, {transform_indices = @transform_6, window_bounds = array<i64: 256, 128>}]} {
    %c0_i32 = arith.constant 0 : i32
    %0 = arith.cmpi eq, %arg0, %c0_i32 : i32
    %c0_i32_0 = arith.constant 0 : i32
    %1 = arith.cmpi eq, %arg1, %c0_i32_0 : i32
    %2 = arith.andi %0, %1 : i1
    %c0_i32_1 = arith.constant 0 : i32
    %3 = arith.cmpi eq, %arg2, %c0_i32_1 : i32
    %4 = arith.andi %2, %3 : i1
    %5 = arith.extui %4 : i1 to i32
    %c0_i32_2 = arith.constant 0 : i32
    %6 = arith.cmpi ne, %5, %c0_i32_2 : i32
    scf.if %6 {
      %c0_i32_13 = arith.constant 0 : i32
      %c0_i32_14 = arith.constant 0 : i32
      %c0_i32_15 = arith.constant 0 : i32
      %c0_i32_16 = arith.constant 0 : i32
      %28 = tpu.memref_slice %arg10[%c0_i32_13, %c0_i32_15, %c0_i32_16] : memref<2x256x128xbf16, #tpu.memory_space<vmem>> -> memref<1x256x128xbf16, #tpu.memory_space<vmem>>
      %29 = tpu.memref_squeeze %28 : memref<1x256x128xbf16, #tpu.memory_space<vmem>> -> memref<256x128xbf16, #tpu.memory_space<vmem>>
      %30 = tpu.memref_slice %arg12[%c0_i32_14] : memref<2x!tpu.dma_semaphore, #tpu.memory_space<semaphore_mem>> -> memref<1x!tpu.dma_semaphore, #tpu.memory_space<semaphore_mem>>
      %31 = tpu.memref_squeeze %30 : memref<1x!tpu.dma_semaphore, #tpu.memory_space<semaphore_mem>> -> memref<!tpu.dma_semaphore, #tpu.memory_space<semaphore_mem>>
      tpu.enqueue_dma source(%arg4 : memref<256x128xbf16, #tpu.memory_space<any>>) target(%29 : memref<256x128xbf16, #tpu.memory_space<vmem>>) target_semaphore(%31 : memref<!tpu.dma_semaphore, #tpu.memory_space<semaphore_mem>>)
      %c1_i32 = arith.constant 1 : i32
      %32 = tpu.memref_slice %arg12[%c1_i32] : memref<2x!tpu.dma_semaphore, #tpu.memory_space<semaphore_mem>> -> memref<1x!tpu.dma_semaphore, #tpu.memory_space<semaphore_mem>>
      %33 = tpu.memref_squeeze %32 : memref<1x!tpu.dma_semaphore, #tpu.memory_space<semaphore_mem>> -> memref<!tpu.dma_semaphore, #tpu.memory_space<semaphore_mem>>
      tpu.enqueue_dma source(%arg3 : memref<256x256xbf16, #tpu.memory_space<any>>) target(%arg13 : memref<256x256xbf16, #tpu.memory_space<vmem>>) target_semaphore(%33 : memref<!tpu.dma_semaphore, #tpu.memory_space<semaphore_mem>>)
      %c1_i32_17 = arith.constant 1 : i32
      %34 = tpu.memref_slice %arg12[%c1_i32_17] : memref<2x!tpu.dma_semaphore, #tpu.memory_space<semaphore_mem>> -> memref<1x!tpu.dma_semaphore, #tpu.memory_space<semaphore_mem>>
      %35 = tpu.memref_squeeze %34 : memref<1x!tpu.dma_semaphore, #tpu.memory_space<semaphore_mem>> -> memref<!tpu.dma_semaphore, #tpu.memory_space<semaphore_mem>>
      tpu.wait_dma2 semaphore(%35 : memref<!tpu.dma_semaphore, #tpu.memory_space<semaphore_mem>>) src(%arg3 : memref<256x256xbf16, #tpu.memory_space<any>>) dst(%arg13 : memref<256x256xbf16, #tpu.memory_space<vmem>>)
      %c0_i32_18 = arith.constant 0 : i32
      %c0_i32_19 = arith.constant 0 : i32
      %c0_i32_20 = arith.constant 0 : i32
      %c0_i32_21 = arith.constant 0 : i32
      %36 = tpu.memref_slice %arg10[%c0_i32_18, %c0_i32_20, %c0_i32_21] : memref<2x256x128xbf16, #tpu.memory_space<vmem>> -> memref<1x256x128xbf16, #tpu.memory_space<vmem>>
      %37 = tpu.memref_squeeze %36 : memref<1x256x128xbf16, #tpu.memory_space<vmem>> -> memref<256x128xbf16, #tpu.memory_space<vmem>>
      %38 = tpu.memref_slice %arg12[%c0_i32_19] : memref<2x!tpu.dma_semaphore, #tpu.memory_space<semaphore_mem>> -> memref<1x!tpu.dma_semaphore, #tpu.memory_space<semaphore_mem>>
      %39 = tpu.memref_squeeze %38 : memref<1x!tpu.dma_semaphore, #tpu.memory_space<semaphore_mem>> -> memref<!tpu.dma_semaphore, #tpu.memory_space<semaphore_mem>>
      tpu.wait_dma2 semaphore(%39 : memref<!tpu.dma_semaphore, #tpu.memory_space<semaphore_mem>>) src(%arg4 : memref<256x128xbf16, #tpu.memory_space<any>>) dst(%37 : memref<256x128xbf16, #tpu.memory_space<vmem>>)
    } else {
    }
    %c0_i32_3 = arith.constant 0 : i32
    %7 = arith.cmpi eq, %arg2, %c0_i32_3 : i32
    %8 = arith.extui %7 : i1 to i32
    %c0_i32_4 = arith.constant 0 : i32
    %9 = arith.cmpi ne, %8, %c0_i32_4 : i32
    scf.if %9 {
      %cst_13 = arith.constant 0.000000e+00 : f32
      %28 = vector.broadcast %cst_13 : f32 to vector<256x128xf32>
      %c0_14 = arith.constant 0 : index
      %c0_15 = arith.constant 0 : index
      %29 = vector.load %arg11[%c0_14, %c0_15] : memref<256x128xf32, #tpu.memory_space<vmem>>, vector<256x128xf32>
      tpu.vector_store %arg11[%c0_14, %c0_15], %28 {strides = array<i32>} : memref<256x128xf32, #tpu.memory_space<vmem>>, vector<256x128xf32>,
    } else {
    }
    %c2_i32 = arith.constant 2 : i32
    %10 = arith.remsi %arg0, %c2_i32 : i32
    %c256_i32 = arith.constant 256 : i32
    %11 = arith.muli %arg2, %c256_i32 : i32
    %12 = tpu.assume_multiple %11, 256 : i32
    %13 = arith.index_cast %10 : i32 to index
    %14 = arith.index_cast %12 : i32 to index
    %c0 = arith.constant 0 : index
    %15 = vector.load %arg10[%13, %14, %c0] : memref<2x256x128xbf16, #tpu.memory_space<vmem>>, vector<1x256x128xbf16>
    %16 = vector.shape_cast %15 : vector<1x256x128xbf16> to vector<256x128xbf16>
    %c256_i32_5 = arith.constant 256 : i32
    %17 = arith.muli %arg1, %c256_i32_5 : i32
    %18 = tpu.assume_multiple %17, 256 : i32
    %19 = arith.index_cast %18 : i32 to index
    %c0_6 = arith.constant 0 : index
    %20 = vector.load %arg13[%19, %c0_6] : memref<256x256xbf16, #tpu.memory_space<vmem>>, vector<256x256xbf16>
    %c0_7 = arith.constant 0 : index
    %c0_8 = arith.constant 0 : index
    %21 = vector.load %arg11[%c0_7, %c0_8] : memref<256x128xf32, #tpu.memory_space<vmem>>, vector<256x128xf32>
    %cst = arith.constant dense<0.000000e+00> : vector<256x128xf32>
    %22 = tpu.matmul %20, %16, %cst {dimension_numbers = #tpu.dot_dimension_numbers<[1], [0], [0], [1], [0, 0, 1, 1], [], []>} : vector<256x256xbf16>, vector<256x128xbf16>, vector<256x128xf32> -> vector<256x128xf32>
    %23 = arith.addf %21, %22 : vector<256x128xf32>
    %c0_9 = arith.constant 0 : index
    %c0_10 = arith.constant 0 : index
    %24 = vector.load %arg11[%c0_9, %c0_10] : memref<256x128xf32, #tpu.memory_space<vmem>>, vector<256x128xf32>
    tpu.vector_store %arg11[%c0_9, %c0_10], %23 {strides = array<i32>} : memref<256x128xf32, #tpu.memory_space<vmem>>, vector<256x128xf32>,
    %c0_i32_11 = arith.constant 0 : i32
    %25 = arith.cmpi eq, %arg2, %c0_i32_11 : i32
    %26 = arith.extui %25 : i1 to i32
    %c0_i32_12 = arith.constant 0 : i32
    %27 = arith.cmpi ne, %26, %c0_i32_12 : i32
    scf.if %27 {
      %c0_13 = arith.constant 0 : index
      %c0_14 = arith.constant 0 : index
      %28 = vector.load %arg11[%c0_13, %c0_14] : memref<256x128xf32, #tpu.memory_space<vmem>>, vector<256x128xf32>
      %29 = arith.truncf %28 : vector<256x128xf32> to vector<256x128xbf16>
      %c0_15 = arith.constant 0 : index
      %c0_16 = arith.constant 0 : index
      %c0_17 = arith.constant 0 : index
      %30 = vector.load %arg5[%c0_15, %c0_16, %c0_17] : memref<1x128x128xbf16, #tpu.memory_space<vmem>>, vector<1x128x128xbf16>
      %31 = vector.shape_cast %30 : vector<1x128x128xbf16> to vector<128x128xbf16>
      %cst_18 = arith.constant dense<0.000000e+00> : vector<256x128xf32>
      %32 = tpu.matmul %29, %31, %cst_18 {dimension_numbers = #tpu.dot_dimension_numbers<[1], [0], [0], [1], [0, 0, 1, 1], [], []>} : vector<256x128xbf16>, vector<128x128xbf16>, vector<256x128xf32> -> vector<256x128xf32>
      %c0_19 = arith.constant 0 : index
      %c0_20 = arith.constant 0 : index
      %c0_21 = arith.constant 0 : index
      %33 = vector.load %arg6[%c0_19, %c0_20, %c0_21] : memref<1x1x128xf32, #tpu.memory_space<vmem>>, vector<1x1x128xf32>
      %34 = vector.shape_cast %33 : vector<1x1x128xf32> to vector<1x128xf32>
      %35 = vector.broadcast %34 : vector<1x128xf32> to vector<256x128xf32>
      %36 = arith.addf %32, %35 : vector<256x128xf32>
      %cst_22 = arith.constant 0.000000e+00 : f32
      %37 = vector.broadcast %cst_22 : f32 to vector<256x128xf32>
      %38 = arith.maximumf %36, %37 : vector<256x128xf32>
      %39 = arith.truncf %38 : vector<256x128xf32> to vector<256x128xbf16>
      %c0_23 = arith.constant 0 : index
      %c0_24 = arith.constant 0 : index
      %c0_25 = arith.constant 0 : index
      %40 = vector.load %arg7[%c0_23, %c0_24, %c0_25] : memref<1x128x128xbf16, #tpu.memory_space<vmem>>, vector<1x128x128xbf16>
      %41 = vector.shape_cast %40 : vector<1x128x128xbf16> to vector<128x128xbf16>
      %cst_26 = arith.constant dense<0.000000e+00> : vector<256x128xf32>
      %42 = tpu.matmul %39, %41, %cst_26 {dimension_numbers = #tpu.dot_dimension_numbers<[1], [0], [0], [1], [0, 0, 1, 1], [], []>} : vector<256x128xbf16>, vector<128x128xbf16>, vector<256x128xf32> -> vector<256x128xf32>
      %c0_27 = arith.constant 0 : index
      %c0_28 = arith.constant 0 : index
      %c0_29 = arith.constant 0 : index
      %43 = vector.load %arg8[%c0_27, %c0_28, %c0_29] : memref<1x1x128xf32, #tpu.memory_space<vmem>>, vector<1x1x128xf32>
      %44 = vector.shape_cast %43 : vector<1x1x128xf32> to vector<1x128xf32>
      %45 = vector.broadcast %44 : vector<1x128xf32> to vector<256x128xf32>
      %46 = arith.addf %42, %45 : vector<256x128xf32>
      %cst_30 = arith.constant 0.000000e+00 : f32
      %47 = vector.broadcast %cst_30 : f32 to vector<256x128xf32>
      %48 = arith.maximumf %46, %47 : vector<256x128xf32>
      %c1_i32 = arith.constant 1 : i32
      %49 = arith.subi %c1_i32, %10 : i32
      %c256_i32_31 = arith.constant 256 : i32
      %50 = arith.muli %arg1, %c256_i32_31 : i32
      %51 = tpu.assume_multiple %50, 256 : i32
      %52 = arith.truncf %48 : vector<256x128xf32> to vector<256x128xbf16>
      %53 = arith.index_cast %49 : i32 to index
      %54 = arith.index_cast %51 : i32 to index
      %c0_32 = arith.constant 0 : index
      %55 = vector.load %arg10[%53, %54, %c0_32] : memref<2x256x128xbf16, #tpu.memory_space<vmem>>, vector<1x256x128xbf16>
      %56 = vector.shape_cast %55 : vector<1x256x128xbf16> to vector<256x128xbf16>
      %57 = vector.shape_cast %52 : vector<256x128xbf16> to vector<1x256x128xbf16>
      tpu.vector_store %arg10[%53, %54, %c0_32], %57 {strides = array<i32>} : memref<2x256x128xbf16, #tpu.memory_space<vmem>>, vector<1x256x128xbf16>,
      %c2_i32_33 = arith.constant 2 : i32
      %58 = arith.cmpi eq, %arg0, %c2_i32_33 : i32
      %59 = arith.extui %58 : i1 to i32
      %c0_i32_34 = arith.constant 0 : i32
      %60 = arith.cmpi ne, %59, %c0_i32_34 : i32
      scf.if %60 {
        %c0_35 = arith.constant 0 : index
        %c0_36 = arith.constant 0 : index
        %61 = vector.load %arg9[%c0_35, %c0_36] : memref<256x128xf32, #tpu.memory_space<vmem>>, vector<256x128xf32>
        tpu.vector_store %arg9[%c0_35, %c0_36], %48 {strides = array<i32>} : memref<256x128xf32, #tpu.memory_space<vmem>>, vector<256x128xf32>,
      } else {
      }
    } else {
    }
    return
  }
  func.func @transform_2(%arg0: i32, %arg1: i32, %arg2: i32) -> (i32, i32, i32) {
    %c0_i32 = arith.constant 0 : i32
    %c0_i32_0 = arith.constant 0 : i32
    %c0_i32_1 = arith.constant 0 : i32
    return %arg0, %c0_i32, %c0_i32_0 : i32, i32, i32
  }
  func.func @transform_3(%arg0: i32, %arg1: i32, %arg2: i32) -> (i32, i32, i32) {
    %c0_i32 = arith.constant 0 : i32
    %c0_i32_0 = arith.constant 0 : i32
    %c0_i32_1 = arith.constant 0 : i32
    return %arg0, %c0_i32, %c0_i32_0 : i32, i32, i32
  }
  func.func @transform_4(%arg0: i32, %arg1: i32, %arg2: i32) -> (i32, i32, i32) {
    %c0_i32 = arith.constant 0 : i32
    %c0_i32_0 = arith.constant 0 : i32
    %c0_i32_1 = arith.constant 0 : i32
    return %arg0, %c0_i32, %c0_i32_0 : i32, i32, i32
  }
  func.func @transform_5(%arg0: i32, %arg1: i32, %arg2: i32) -> (i32, i32, i32) {
    %c0_i32 = arith.constant 0 : i32
    %c0_i32_0 = arith.constant 0 : i32
    %c0_i32_1 = arith.constant 0 : i32
    return %arg0, %c0_i32, %c0_i32_0 : i32, i32, i32
  }
  func.func @transform_6(%arg0: i32, %arg1: i32, %arg2: i32) -> (i32, i32) {
    %c2_i32 = arith.constant 2 : i32
    %0 = arith.cmpi eq, %arg0, %c2_i32 : i32
    %c0_i32 = arith.constant 0 : i32
    %1 = arith.select %0, %arg1, %c0_i32 : i32
    %c0_i32_0 = arith.constant 0 : i32
    %c0_i32_1 = arith.constant 0 : i32
    return %1, %c0_i32_0 : i32, i32
  }
}

</mosaic_0001>

<llo_original>
// kernel: tpu_custom_call.1
$region0: #{tpu_custom_call.1}
  #allocation0 [shape = 'u32[]', space=smem, size = 0x4, offset = 0x4, fixed_abs, tag = 'smem constant byte address 0x4 - core index']
  #allocation1 [shape = 'u32[144,128]{1,0:T(1,128)}', space=vmem, size = 0x12000, scoped, tag = 'internal scratch']
  #allocation2 [shape = 'bf16[2,256,128]{2,1,0:T(8,128)(2,1)}', space=vmem, size = 0x20000, scoped, tag = 'scratch operand']
  #allocation3 [shape = 'f32[256,128]{1,0:T(8,128)}', space=vmem, size = 0x20000, scoped, tag = 'scratch operand']
  #allocation4 [shape = 's32[2]{0}', space=sflag, size = 0x8, scoped, tag = 'scratch operand']
  #allocation5 [shape = 'bf16[256,256]{1,0:T(8,128)(2,1)}', space=vmem, size = 0x20000, scoped, tag = 'scratch operand']
  #allocation12 [shape = 's32[]', space=sflag, size = 0x4, offset = 0, fixed_abs, tag = 'sflag constant byte address 0x0 - dummy sync flag']
  #allocation13 [shape = 's32[]', space=sflag, size = 0x4, offset = 0, fixed_abs, tag = 'sflag constant byte address 0x0 - dummy sync flag']
  #allocation14 [shape = 'u32[]', space=smem, size = 0x4, offset = 0x44, fixed_abs, tag = 'smem constant byte address 0x44 - assertion arg 0']
  #allocation15 [shape = 'u32[]', space=smem, size = 0x4, offset = 0x48, fixed_abs, tag = 'smem constant byte address 0x48 - assertion arg 1']
  #allocation16 [shape = 's32[]', space=sflag, size = 0x4, offset = 0, fixed_abs, tag = 'sflag constant byte address 0x0 - dummy sync flag']
  #allocation17 [shape = 's32[]', space=sflag, size = 0x4, offset = 0, fixed_abs, tag = 'sflag constant byte address 0x0 - dummy sync flag']
  %s0 = inlined_call_operand.hbm [shape: bf16[256,256], index: 0, kind: input, shape index: {}]
  %s1 = inlined_call_operand.hbm [shape: bf16[256,128], index: 1, kind: input, shape index: {}]
  %s2 = inlined_call_operand.hbm [shape: bf16[3,128,128], index: 2, kind: input, shape index: {}]
  %s3 = inlined_call_operand.vmem [shape: f32[3,1,128], index: 3, kind: input, shape index: {}]
  %s4 = inlined_call_operand.hbm [shape: bf16[3,128,128], index: 4, kind: input, shape index: {}]
  %s5 = inlined_call_operand.vmem [shape: f32[3,1,128], index: 5, kind: input, shape index: {}]
  %s6 = inlined_call_operand.hbm [shape: f32[256,128], index: 6, kind: output, shape index: {}]
  %s7 = sld [smem:[#allocation0]]
  $region81: #{tpu_custom_call.1} parent=0
    _
  %s9 = ssub.s32 1, %s7
  %s10 = scalar_select 0, %s9, %s7
  $region1: #{tpu_custom_call.1} parent=0
    #allocation6 [shape = 'u8[65536]{0}', space=vmem, size = 0x10000, scoped, tag = 'input window, operand 2']
    #allocation7 [shape = 's32[2]{0}', space=sflag, size = 0x8, scoped, tag = 'scoped memory for tpu_custom_call.1']
    #allocation8 [shape = 's32[2]{0}', space=sflag, size = 0x8, scoped, tag = 'scoped memory for tpu_custom_call.1']
    #allocation9 [shape = 'u8[65536]{0}', space=vmem, size = 0x10000, scoped, tag = 'input window, operand 4']
    #allocation10 [shape = 's32[2]{0}', space=sflag, size = 0x8, scoped, tag = 'scoped memory for tpu_custom_call.1']
    #allocation11 [shape = 'u8[262144]{0}', space=vmem, size = 0x40000, scoped, tag = 'output window, operand 0']
    %11 = vsyncpa [#allocation7], 0
    %s12 = scalar_lea.sflag [#allocation7], 1
    %13 = vsyncpa %s12, 0
    %14 = vsyncpa [#allocation10], 0
    %s15 = scalar_lea.sflag [#allocation10], 1
    %16 = vsyncpa %s15, 0
    %17 = vsyncpa [#allocation8], 0
    %s18 = scalar_lea.sflag [#allocation8], 1
    %19 = vsyncpa %s18, 0
    loop: start=0, step=1, limit=5
    $region2: #{tpu_custom_call.1} parent=1 // loop_pre_header
      _
    $region3: #{tpu_custom_call.1} parent=1 // loop_header
      %s21 = sphi 0, %s25
      %p22 = scmp.ge.s32.totalorder %s21, 5
      %s28 = sphi 0, %s47
      %s29 = sphi 0, %s43
      %s30 = sphi 0, %s39
      %s31 = sphi 0, %s28
      %s32 = sphi 0, %s29
      %s33 = sphi 0, %s30
      %s34 = sphi 0, %s31
      %s35 = sphi 0, %s32
      %s36 = sphi 0, %s33
      %s50 = sphi 0, %s52
      %s53 = sphi 0, %s50
      %s54 = sphi 0, %s53
      %s70 = sphi 0, %s54
      %s76 = sphi 0, %s78
      %s79 = sphi 0, %s76
      %s80 = sphi 0, %s79
      %s96 = sphi 0, %s80
      %s102 = sphi 0, %s104
      %s105 = sphi 0, %s102
      %s106 = sphi 0, %s105
      %s122 = sphi 0, %s106
      %s128 = sphi 0, %s130
      %s131 = sphi 0, %s128
      %s132 = sphi 0, %s131
      %s148 = sphi 0, %s132
      %s158 = sphi 0, %s160
      %s161 = sphi 0, %s158
      %s162 = sphi 0, %s161
      %s178 = sphi 0, %s162
    $region4: #{tpu_custom_call.1} parent=1 // loop_header_branch
      %24 = sbr.rel (%p22) target = $region8
    $region5: #{tpu_custom_call.1} parent=1 // loop_body
      %s26 = ssub.s32 %s21, 1
      %s27 = ssub.s32 %s21, 2
      %s37 = sadd.s32 1, %s30
      %p38 = scmp.ge.s32.totalorder %s37, 1
      %s39 = scalar_select %p38, 0, %s37
      %s40 = sadd.s32 1, %s29
      %s41 = scalar_select %p38, %s40, %s29
      %p42 = scmp.ge.s32.totalorder %s41, 1
      %s43 = scalar_select %p42, 0, %s41
      %s44 = sadd.s32 1, %s28
      %s45 = scalar_select %p42, %s44, %s28
      %p46 = scmp.ge.s32.totalorder %s45, 3
      %s47 = scalar_select %p46, 0, %s45
      %s48 = ssub.s32 %s28, %s47
      %p49 = scmp.eq.s32.totalorder %s48, 0
      %s51 = sadd.s32 %s50, 1
      %s52 = scalar_select %p49, %s50, %s51
      %p55 = pneg %p49
      %p56 = scmp.eq.s32.totalorder %s21, 2
      %p57 = por %p55, %p56
      %p58 = scmp.ne.s32.totalorder %s50, %s53
      %p59 = scmp.eq.s32.totalorder %s21, 0
      %p60 = por %p58, %p59
      %p61 = scmp.ne.s32.totalorder %s50, %s53
      %p62 = scmp.eq.s32.totalorder %s26, 2
      %p63 = por %p61, %p62
      %p64 = scmp.ne.s32.totalorder %s53, %s54
      %p65 = scmp.eq.s32.totalorder %s26, 0
      %p66 = por %p64, %p65
      %p67 = scmp.ne.s32.totalorder %s53, %s54
      %p68 = scmp.eq.s32.totalorder %s27, 2
      %p69 = por %p67, %p68
      %p71 = scmp.ne.s32.totalorder %s54, %s70
      %p72 = scmp.eq.s32.totalorder %s27, 0
      %p73 = por %p71, %p72
      %s74 = ssub.s32 %s28, %s47
      %p75 = scmp.eq.s32.totalorder %s74, 0
      %s77 = sadd.s32 %s76, 1
      %s78 = scalar_select %p75, %s76, %s77
      %p81 = pneg %p75
      %p82 = scmp.eq.s32.totalorder %s21, 2
      %p83 = por %p81, %p82
      %p84 = scmp.ne.s32.totalorder %s76, %s79
      %p85 = scmp.eq.s32.totalorder %s21, 0
      %p86 = por %p84, %p85
      %p87 = scmp.ne.s32.totalorder %s76, %s79
      %p88 = scmp.eq.s32.totalorder %s26, 2
      %p89 = por %p87, %p88
      %p90 = scmp.ne.s32.totalorder %s79, %s80
      %p91 = scmp.eq.s32.totalorder %s26, 0
      %p92 = por %p90, %p91
      %p93 = scmp.ne.s32.totalorder %s79, %s80
      %p94 = scmp.eq.s32.totalorder %s27, 2
      %p95 = por %p93, %p94
      %p97 = scmp.ne.s32.totalorder %s80, %s96
      %p98 = scmp.eq.s32.totalorder %s27, 0
      %p99 = por %p97, %p98
      %s100 = ssub.s32 %s28, %s47
      %p101 = scmp.eq.s32.totalorder %s100, 0
      %s103 = sadd.s32 %s102, 1
      %s104 = scalar_select %p101, %s102, %s103
      %p107 = pneg %p101
      %p108 = scmp.eq.s32.totalorder %s21, 2
      %p109 = por %p107, %p108
      %p110 = scmp.ne.s32.totalorder %s102, %s105
      %p111 = scmp.eq.s32.totalorder %s21, 0
      %p112 = por %p110, %p111
      %p113 = scmp.ne.s32.totalorder %s102, %s105
      %p114 = scmp.eq.s32.totalorder %s26, 2
      %p115 = por %p113, %p114
      %p116 = scmp.ne.s32.totalorder %s105, %s106
      %p117 = scmp.eq.s32.totalorder %s26, 0
      %p118 = por %p116, %p117
      %p119 = scmp.ne.s32.totalorder %s105, %s106
      %p120 = scmp.eq.s32.totalorder %s27, 2
      %p121 = por %p119, %p120
      %p123 = scmp.ne.s32.totalorder %s106, %s122
      %p124 = scmp.eq.s32.totalorder %s27, 0
      %p125 = por %p123, %p124
      %s126 = ssub.s32 %s28, %s47
      %p127 = scmp.eq.s32.totalorder %s126, 0
      %s129 = sadd.s32 %s128, 1
      %s130 = scalar_select %p127, %s128, %s129
      %p133 = pneg %p127
      %p134 = scmp.eq.s32.totalorder %s21, 2
      %p135 = por %p133, %p134
      %p136 = scmp.ne.s32.totalorder %s128, %s131
      %p137 = scmp.eq.s32.totalorder %s21, 0
      %p138 = por %p136, %p137
      %p139 = scmp.ne.s32.totalorder %s128, %s131
      %p140 = scmp.eq.s32.totalorder %s26, 2
      %p141 = por %p139, %p140
      %p142 = scmp.ne.s32.totalorder %s131, %s132
      %p143 = scmp.eq.s32.totalorder %s26, 0
      %p144 = por %p142, %p143
      %p145 = scmp.ne.s32.totalorder %s131, %s132
      %p146 = scmp.eq.s32.totalorder %s27, 2
      %p147 = por %p145, %p146
      %p149 = scmp.ne.s32.totalorder %s132, %s148
      %p150 = scmp.eq.s32.totalorder %s27, 0
      %p151 = por %p149, %p150
      %p152 = scmp.eq.s32.totalorder %s28, 2
      %s153 = scalar_select %p152, %s29, 0
      %p154 = scmp.eq.s32.totalorder %s47, 2
      %s155 = scalar_select %p154, %s43, 0
      %s156 = ssub.s32 %s153, %s155
      %p157 = scmp.eq.s32.totalorder %s156, 0
      %s159 = sadd.s32 %s158, 1
      %s160 = scalar_select %p157, %s158, %s159
      %p163 = pneg %p157
      %p164 = scmp.eq.s32.totalorder %s21, 2
      %p165 = por %p163, %p164
      %p166 = scmp.ne.s32.totalorder %s158, %s161
      %p167 = scmp.eq.s32.totalorder %s21, 0
      %p168 = por %p166, %p167
      %p169 = scmp.ne.s32.totalorder %s158, %s161
      %p170 = scmp.eq.s32.totalorder %s26, 2
      %p171 = por %p169, %p170
      %p172 = scmp.ne.s32.totalorder %s161, %s162
      %p173 = scmp.eq.s32.totalorder %s26, 0
      %p174 = por %p172, %p173
      %p175 = scmp.ne.s32.totalorder %s161, %s162
      %p176 = scmp.eq.s32.totalorder %s27, 2
      %p177 = por %p175, %p176
      %p179 = scmp.ne.s32.totalorder %s162, %s178
      %p180 = scmp.eq.s32.totalorder %s27, 0
      %p181 = por %p179, %p180
      %p182 = scmp.le.s32.totalorder 1, %s21
      %p183 = scmp.lt.s32.totalorder %s21, 4
      %p184 = pnand %p182, %p183
      %p185 = pneg %p184
      // Predicated region
      $region9: #{tpu_custom_call.1} parent=5 // pred_check
        _
      $region10: #{tpu_custom_call.1} parent=5 // pred_check_branch
        %187 = sbr.rel (%p184) target = $region12
      $region11: #{tpu_custom_call.1} parent=5 // pred_region
        %s188 = ssub.s32 %s21, 1
      $region12: #{tpu_custom_call.1} parent=5 // pred_fallthru
        _
      %p189 = scmp.lt.s32.totalorder %s21, 3
      // Predicated region
      $region13: #{tpu_custom_call.1} parent=5 // pred_check
        %p190 = pneg %p189
      $region14: #{tpu_custom_call.1} parent=5 // pred_check_branch
        %192 = sbr.rel (%p190) target = $region16
      $region15: #{tpu_custom_call.1} parent=5 // pred_region
        // Predicated region
        $region17: #{tpu_custom_call.1} parent=15 // pred_check
          %p193 = pneg %p60
        $region18: #{tpu_custom_call.1} parent=15 // pred_check_branch
          %195 = sbr.rel (%p193) target = $region20
        $region19: #{tpu_custom_call.1} parent=15 // pred_region
          %s196 = sand.u32 %s50, 1
          %s197 = scalar_lea.sflag [#allocation7], %s196
          %s198 = sand.u32 %s50, 1
          %s199 = smul.addr %s198, 64
          %s200 = scalar_lea.vmem [#allocation6], %s199
          %s202 = ssub.s32 1024, 1024
          %203 = vsyncadd %s197, %s202
          %s204 = smul.addr %s28, 16
          %s205 = smul.addr %s204, 64
          %s206 = scalar_lea.hbm %s2, %s205
          %s207 = sshll.u32 %s200, 4
          %s208 = int_to_ptr.vmem [resolvable:$true] %s207
          %213 = dma.hbm_to_vmem [thread:$0]  %s206, 1024, %s208, %s197, 64, 64, 4
        $region20: #{tpu_custom_call.1} parent=15 // pred_fallthru
          _
        // Predicated region
        $region21: #{tpu_custom_call.1} parent=15 // pred_check
          %p214 = pneg %p86
        $region22: #{tpu_custom_call.1} parent=15 // pred_check_branch
          %216 = sbr.rel (%p214) target = $region24
        $region23: #{tpu_custom_call.1} parent=15 // pred_region
          %p217 = scmp.lt.s32.totalorder %s28, 2
          %s218 = scalar_select %p217, %s28, 2
          %s219 = scalar_lea.vmem %s3, %s218
        $region24: #{tpu_custom_call.1} parent=15 // pred_fallthru
          _
        // Predicated region
        $region25: #{tpu_custom_call.1} parent=15 // pred_check
          %p220 = pneg %p112
        $region26: #{tpu_custom_call.1} parent=15 // pred_check_branch
          %222 = sbr.rel (%p220) target = $region28
        $region27: #{tpu_custom_call.1} parent=15 // pred_region
          %s223 = sand.u32 %s102, 1
          %s224 = scalar_lea.sflag [#allocation10], %s223
          %s225 = sand.u32 %s102, 1
          %s226 = smul.addr %s225, 64
          %s227 = scalar_lea.vmem [#allocation9], %s226
          %s229 = ssub.s32 1024, 1024
          %230 = vsyncadd %s224, %s229
          %s231 = smul.addr %s28, 16
          %s232 = smul.addr %s231, 64
          %s233 = scalar_lea.hbm %s4, %s232
          %s234 = sshll.u32 %s227, 4
          %s235 = int_to_ptr.vmem [resolvable:$true] %s234
          %240 = dma.hbm_to_vmem [thread:$0]  %s233, 1024, %s235, %s224, 64, 64, 4
        $region28: #{tpu_custom_call.1} parent=15 // pred_fallthru
          _
        // Predicated region
        $region29: #{tpu_custom_call.1} parent=15 // pred_check
          %p241 = pneg %p138
        $region30: #{tpu_custom_call.1} parent=15 // pred_check_branch
          %243 = sbr.rel (%p241) target = $region32
        $region31: #{tpu_custom_call.1} parent=15 // pred_region
          %p244 = scmp.lt.s32.totalorder %s28, 2
          %s245 = scalar_select %p244, %s28, 2
          %s246 = scalar_lea.vmem %s5, %s245
        $region32: #{tpu_custom_call.1} parent=15 // pred_fallthru
          _
      $region16: #{tpu_custom_call.1} parent=5 // pred_fallthru
        _
      %p247 = scmp.le.s32.totalorder 1, %s21
      %p248 = scmp.lt.s32.totalorder %s21, 4
      %p249 = pnand %p247, %p248
      %p250 = pneg %p249
      // Predicated region
      $region33: #{tpu_custom_call.1} parent=5 // pred_check
        _
      $region34: #{tpu_custom_call.1} parent=5 // pred_check_branch
        %252 = sbr.rel (%p249) target = $region36
      $region35: #{tpu_custom_call.1} parent=5 // pred_region
        %s253 = ssub.s32 %s21, 1
        %s254 = sand.u32 %s53, 1
        %s255 = scalar_lea.sflag [#allocation7], %s254
        %s256 = sand.u32 %s53, 1
        %s257 = smul.addr %s256, 64
        %s258 = scalar_lea.vmem [#allocation6], %s257
        // Predicated region
        $region37: #{tpu_custom_call.1} parent=35 // pred_check
          %p259 = pneg %p66
        $region38: #{tpu_custom_call.1} parent=35 // pred_check_branch
          %261 = sbr.rel (%p259) target = $region40
        $region39: #{tpu_custom_call.1} parent=35 // pred_region
          %262 = dma.done %s255, 1024
        $region40: #{tpu_custom_call.1} parent=35 // pred_fallthru
          _
        %s263 = sand.u32 %s105, 1
        %s264 = scalar_lea.sflag [#allocation10], %s263
        %s265 = sand.u32 %s105, 1
        %s266 = smul.addr %s265, 64
        %s267 = scalar_lea.vmem [#allocation9], %s266
        // Predicated region
        $region41: #{tpu_custom_call.1} parent=35 // pred_check
          %p268 = pneg %p118
        $region42: #{tpu_custom_call.1} parent=35 // pred_check_branch
          %270 = sbr.rel (%p268) target = $region44
        $region43: #{tpu_custom_call.1} parent=35 // pred_region
          %271 = dma.done %s264, 1024
        $region44: #{tpu_custom_call.1} parent=35 // pred_fallthru
          _
        %s272 = sand.u32 %s53, 1
        %s273 = scalar_lea.sflag [#allocation7], %s272
        %s274 = sand.u32 %s53, 1
        %s275 = smul.addr %s274, 64
        %s276 = scalar_lea.vmem [#allocation6], %s275
        %p277 = pneg %p66
        %p278 = pneg %p63
        %p279 = scmp.lt.s32.totalorder %s31, 2
        %s280 = scalar_select %p279, %s31, 2
        %s281 = scalar_lea.vmem %s3, %s280
        %p282 = pneg %p92
        %p283 = pneg %p89
        %s284 = sand.u32 %s105, 1
        %s285 = scalar_lea.sflag [#allocation10], %s284
        %s286 = sand.u32 %s105, 1
        %s287 = smul.addr %s286, 64
        %s288 = scalar_lea.vmem [#allocation9], %s287
        %p289 = pneg %p118
        %p290 = pneg %p115
        %p291 = scmp.lt.s32.totalorder %s31, 2
        %s292 = scalar_select %p291, %s31, 2
        %s293 = scalar_lea.vmem %s5, %s292
        %p294 = pneg %p144
        %p295 = pneg %p141
        %p296 = pneg %p174
        %p297 = pneg %p171
        %s298 = sand.u32 %s161, 1
        %s299 = scalar_lea.sflag [#allocation8], %s298
        %s300 = sand.u32 %s161, 1
        %s301 = smul.addr %s300, 256
        %s302 = scalar_lea.vmem [#allocation11], %s301
        %p303 = scmp.lt.s32.totalorder %s31, 2
        %s304 = scalar_select %p303, %s31, 2
        %s305 = scalar_lea.vmem %s3, %s304
        %p306 = scmp.lt.s32.totalorder %s31, 2
        %s307 = scalar_select %p306, %s31, 2
        %s308 = scalar_lea.vmem %s5, %s307
        %p309 = scmp.eq.s32.totalorder %s31, 2
        %s310 = scalar_select %p309, %s32, 0
        %s311 = smul.u32 32, %s310
        %p313 = scmp.eq.s32.totalorder %s31, 0
        %p314 = scmp.eq.s32.totalorder %s32, 0
        %p315 = pnand %p313, %p314
        %p316 = pneg %p315
        %p317 = scmp.eq.s32.totalorder %s33, 0
        %p318 = pnand %p316, %p317
        %p319 = pneg %p318
        // Predicated region
        $region45: #{tpu_custom_call.1} parent=35 // pred_check
          _
        $region46: #{tpu_custom_call.1} parent=35 // pred_check_branch
          %321 = sbr.rel (%p318) target = $region48
        $region47: #{tpu_custom_call.1} parent=35 // pred_region
          // Predicated region
          $region49: #{tpu_custom_call.1} parent=47 // pred_check
            _
          $region50: #{tpu_custom_call.1} parent=47 // pred_check_branch
            %323 = sbr.rel target = $region52
          $region51: #{tpu_custom_call.1} parent=47 // pred_region
            %324 = sst [smem:[#allocation14]] [#allocation13]
            %325 = sst [smem:[#allocation15]] [#allocation12]
          $region52: #{tpu_custom_call.1} parent=47 // pred_fallthru
            _
          %327 = shalt.err (0)
          %s329 = sshll.u32 [#allocation2], 4
          %s330 = int_to_ptr.vmem [resolvable:$true] %s329
          %332 = dma.hbm_to_vmem [thread:$0]  %s1, 2048, %s330, [#allocation4]
          %s333 = scalar_lea.sflag [#allocation4], 1
          // Predicated region
          $region53: #{tpu_custom_call.1} parent=47 // pred_check
            _
          $region54: #{tpu_custom_call.1} parent=47 // pred_check_branch
            %335 = sbr.rel target = $region56
          $region55: #{tpu_custom_call.1} parent=47 // pred_region
            %336 = sst [smem:[#allocation14]] [#allocation17]
            %337 = sst [smem:[#allocation15]] [#allocation16]
          $region56: #{tpu_custom_call.1} parent=47 // pred_fallthru
            _
          %339 = shalt.err (0)
          %s341 = sshll.u32 [#allocation5], 4
          %s342 = int_to_ptr.vmem [resolvable:$true] %s341
          %344 = dma.hbm_to_vmem [thread:$0]  %s0, 4096, %s342, %s333
          %s345 = smul.u32 4, 32
          %s346 = smul.u32 %s345, 2
          %s347 = sshll.u32 %s346, 4
          %348 = dma.done %s333, %s347
          %s349 = smul.u32 %s345, 1
          %s350 = sshll.u32 %s349, 4
          %351 = dma.done [#allocation4], %s350
        $region48: #{tpu_custom_call.1} parent=35 // pred_fallthru
          _
        // Predicated region
        $region57: #{tpu_custom_call.1} parent=35 // pred_check
          %p352 = pneg %p317
        $region58: #{tpu_custom_call.1} parent=35 // pred_check_branch
          %354 = sbr.rel (%p352) target = $region60
        $region59: #{tpu_custom_call.1} parent=35 // pred_region
          %355 = vst [vmem:[#allocation3] sm:$0xff] 0.0
          %356 = vst [vmem:[#allocation3 + $0x8] sm:$0xff] 0.0
          %357 = vst [vmem:[#allocation3 + $0x10] sm:$0xff] 0.0
          %358 = vst [vmem:[#allocation3 + $0x18] sm:$0xff] 0.0
          %359 = vst [vmem:[#allocation3 + $0x20] sm:$0xff] 0.0
          %360 = vst [vmem:[#allocation3 + $0x28] sm:$0xff] 0.0
          %361 = vst [vmem:[#allocation3 + $0x30] sm:$0xff] 0.0
          %362 = vst [vmem:[#allocation3 + $0x38] sm:$0xff] 0.0
          %363 = vst [vmem:[#allocation3 + $0x40] sm:$0xff] 0.0
          %364 = vst [vmem:[#allocation3 + $0x48] sm:$0xff] 0.0
          %365 = vst [vmem:[#allocation3 + $0x50] sm:$0xff] 0.0
          %366 = vst [vmem:[#allocation3 + $0x58] sm:$0xff] 0.0
          %367 = vst [vmem:[#allocation3 + $0x60] sm:$0xff] 0.0
          %368 = vst [vmem:[#allocation3 + $0x68] sm:$0xff] 0.0
          %369 = vst [vmem:[#allocation3 + $0x70] sm:$0xff] 0.0
          %370 = vst [vmem:[#allocation3 + $0x78] sm:$0xff] 0.0
          %371 = vst [vmem:[#allocation3 + $0x80] sm:$0xff] 0.0
          %372 = vst [vmem:[#allocation3 + $0x88] sm:$0xff] 0.0
          %373 = vst [vmem:[#allocation3 + $0x90] sm:$0xff] 0.0
          %374 = vst [vmem:[#allocation3 + $0x98] sm:$0xff] 0.0
          %375 = vst [vmem:[#allocation3 + $0xa0] sm:$0xff] 0.0
          %376 = vst [vmem:[#allocation3 + $0xa8] sm:$0xff] 0.0
          %377 = vst [vmem:[#allocation3 + $0xb0] sm:$0xff] 0.0
          %378 = vst [vmem:[#allocation3 + $0xb8] sm:$0xff] 0.0
          %379 = vst [vmem:[#allocation3 + $0xc0] sm:$0xff] 0.0
          %380 = vst [vmem:[#allocation3 + $0xc8] sm:$0xff] 0.0
          %381 = vst [vmem:[#allocation3 + $0xd0] sm:$0xff] 0.0
          %382 = vst [vmem:[#allocation3 + $0xd8] sm:$0xff] 0.0
          %383 = vst [vmem:[#allocation3 + $0xe0] sm:$0xff] 0.0
          %384 = vst [vmem:[#allocation3 + $0xe8] sm:$0xff] 0.0
          %385 = vst [vmem:[#allocation3 + $0xf0] sm:$0xff] 0.0
          %386 = vst [vmem:[#allocation3 + $0xf8] sm:$0xff] 0.0
        $region60: #{tpu_custom_call.1} parent=35 // pred_fallthru
          _
        %p387 = scmp.lt.s32.totalorder %s31, 0
        %s388 = ssub.s32 0, %s31
        %s389 = scalar_select %p387, %s388, %s31
        %s390 = sand.u32 %s389, 1
        %s391 = ssub.s32 0, %s390
        %s392 = scalar_select %p387, %s391, %s390
        %s393 = smul.u32 %s33, 256
        %s394 = sshra.s32 %s393, 3
        %s395 = sand.u32 %s393, 7
        %s396 = smul.u32 %s392, 32
        %s397 = sadd.s32 %s394, %s396
        %s398 = smul.addr %s397, 4
        %s399 = scalar_lea.vmem [#allocation2], %s398
        %v400 = vld [vmem:[%s399] sm:$0xf]
        %v401 = vld [vmem:[%s399 + $0x4] sm:$0xf]
        %v402 = vld [vmem:[%s399 + $0x8] sm:$0xf]
        %v403 = vld [vmem:[%s399 + $0xc] sm:$0xf]
        %v404 = vld [vmem:[%s399 + $0x10] sm:$0xf]
        %v405 = vld [vmem:[%s399 + $0x14] sm:$0xf]
        %v406 = vld [vmem:[%s399 + $0x18] sm:$0xf]
        %v407 = vld [vmem:[%s399 + $0x1c] sm:$0xf]
        %v408 = vld [vmem:[%s399 + $0x20] sm:$0xf]
        %v409 = vld [vmem:[%s399 + $0x24] sm:$0xf]
        %v410 = vld [vmem:[%s399 + $0x28] sm:$0xf]
        %v411 = vld [vmem:[%s399 + $0x2c] sm:$0xf]
        %v412 = vld [vmem:[%s399 + $0x30] sm:$0xf]
        %v413 = vld [vmem:[%s399 + $0x34] sm:$0xf]
        %v414 = vld [vmem:[%s399 + $0x38] sm:$0xf]
        %v415 = vld [vmem:[%s399 + $0x3c] sm:$0xf]
        %v416 = vld [vmem:[%s399 + $0x40] sm:$0xf]
        %v417 = vld [vmem:[%s399 + $0x44] sm:$0xf]
        %v418 = vld [vmem:[%s399 + $0x48] sm:$0xf]
        %v419 = vld [vmem:[%s399 + $0x4c] sm:$0xf]
        %v420 = vld [vmem:[%s399 + $0x50] sm:$0xf]
        %v421 = vld [vmem:[%s399 + $0x54] sm:$0xf]
        %v422 = vld [vmem:[%s399 + $0x58] sm:$0xf]
        %v423 = vld [vmem:[%s399 + $0x5c] sm:$0xf]
        %v424 = vld [vmem:[%s399 + $0x60] sm:$0xf]
        %v425 = vld [vmem:[%s399 + $0x64] sm:$0xf]
        %v426 = vld [vmem:[%s399 + $0x68] sm:$0xf]
        %v427 = vld [vmem:[%s399 + $0x6c] sm:$0xf]
        %v428 = vld [vmem:[%s399 + $0x70] sm:$0xf]
        %v429 = vld [vmem:[%s399 + $0x74] sm:$0xf]
        %v430 = vld [vmem:[%s399 + $0x78] sm:$0xf]
        %v431 = vld [vmem:[%s399 + $0x7c] sm:$0xf]
        %s432 = smul.u32 %s32, 256
        %s433 = sshra.s32 %s432, 3
        %s434 = sand.u32 %s432, 7
        %s435 = smul.u32 %s433, 2
        %s436 = smul.addr %s435, 4
        %s437 = scalar_lea.vmem [#allocation5], %s436
        %v438 = vld [vmem:[%s437] sm:$0xff]
        %v439 = vld [vmem:[%s437 + $0x8] sm:$0xff]
        %v440 = vld [vmem:[%s437 + $0x10] sm:$0xff]
        %v441 = vld [vmem:[%s437 + $0x18] sm:$0xff]
        %v442 = vld [vmem:[%s437 + $0x20] sm:$0xff]
        %v443 = vld [vmem:[%s437 + $0x28] sm:$0xff]
        %v444 = vld [vmem:[%s437 + $0x30] sm:$0xff]
        %v445 = vld [vmem:[%s437 + $0x38] sm:$0xff]
        %v446 = vld [vmem:[%s437 + $0x40] sm:$0xff]
        %v447 = vld [vmem:[%s437 + $0x48] sm:$0xff]
        %v448 = vld [vmem:[%s437 + $0x50] sm:$0xff]
        %v449 = vld [vmem:[%s437 + $0x58] sm:$0xff]
        %v450 = vld [vmem:[%s437 + $0x60] sm:$0xff]
        %v451 = vld [vmem:[%s437 + $0x68] sm:$0xff]
        %v452 = vld [vmem:[%s437 + $0x70] sm:$0xff]
        %v453 = vld [vmem:[%s437 + $0x78] sm:$0xff]
        %v454 = vld [vmem:[%s437 + $0x80] sm:$0xff]
        %v455 = vld [vmem:[%s437 + $0x88] sm:$0xff]
        %v456 = vld [vmem:[%s437 + $0x90] sm:$0xff]
        %v457 = vld [vmem:[%s437 + $0x98] sm:$0xff]
        %v458 = vld [vmem:[%s437 + $0xa0] sm:$0xff]
        %v459 = vld [vmem:[%s437 + $0xa8] sm:$0xff]
        %v460 = vld [vmem:[%s437 + $0xb0] sm:$0xff]
        %v461 = vld [vmem:[%s437 + $0xb8] sm:$0xff]
        %v462 = vld [vmem:[%s437 + $0xc0] sm:$0xff]
        %v463 = vld [vmem:[%s437 + $0xc8] sm:$0xff]
        %v464 = vld [vmem:[%s437 + $0xd0] sm:$0xff]
        %v465 = vld [vmem:[%s437 + $0xd8] sm:$0xff]
        %v466 = vld [vmem:[%s437 + $0xe0] sm:$0xff]
        %v467 = vld [vmem:[%s437 + $0xe8] sm:$0xff]
        %v468 = vld [vmem:[%s437 + $0xf0] sm:$0xff]
        %v469 = vld [vmem:[%s437 + $0xf8] sm:$0xff]
        %v470 = vld [vmem:[#allocation3] sm:$0xff]
        %v471 = vld [vmem:[#allocation3 + $0x8] sm:$0xff]
        %v472 = vld [vmem:[#allocation3 + $0x10] sm:$0xff]
        %v473 = vld [vmem:[#allocation3 + $0x18] sm:$0xff]
        %v474 = vld [vmem:[#allocation3 + $0x20] sm:$0xff]
        %v475 = vld [vmem:[#allocation3 + $0x28] sm:$0xff]
        %v476 = vld [vmem:[#allocation3 + $0x30] sm:$0xff]
        %v477 = vld [vmem:[#allocation3 + $0x38] sm:$0xff]
        %v478 = vld [vmem:[#allocation3 + $0x40] sm:$0xff]
        %v479 = vld [vmem:[#allocation3 + $0x48] sm:$0xff]
        %v480 = vld [vmem:[#allocation3 + $0x50] sm:$0xff]
        %v481 = vld [vmem:[#allocation3 + $0x58] sm:$0xff]
        %v482 = vld [vmem:[#allocation3 + $0x60] sm:$0xff]
        %v483 = vld [vmem:[#allocation3 + $0x68] sm:$0xff]
        %v484 = vld [vmem:[#allocation3 + $0x70] sm:$0xff]
        %v485 = vld [vmem:[#allocation3 + $0x78] sm:$0xff]
        %v486 = vld [vmem:[#allocation3 + $0x80] sm:$0xff]
        %v487 = vld [vmem:[#allocation3 + $0x88] sm:$0xff]
        %v488 = vld [vmem:[#allocation3 + $0x90] sm:$0xff]
        %v489 = vld [vmem:[#allocation3 + $0x98] sm:$0xff]
        %v490 = vld [vmem:[#allocation3 + $0xa0] sm:$0xff]
        %v491 = vld [vmem:[#allocation3 + $0xa8] sm:$0xff]
        %v492 = vld [vmem:[#allocation3 + $0xb0] sm:$0xff]
        %v493 = vld [vmem:[#allocation3 + $0xb8] sm:$0xff]
        %v494 = vld [vmem:[#allocation3 + $0xc0] sm:$0xff]
        %v495 = vld [vmem:[#allocation3 + $0xc8] sm:$0xff]
        %v496 = vld [vmem:[#allocation3 + $0xd0] sm:$0xff]
        %v497 = vld [vmem:[#allocation3 + $0xd8] sm:$0xff]
        %v498 = vld [vmem:[#allocation3 + $0xe0] sm:$0xff]
        %v499 = vld [vmem:[#allocation3 + $0xe8] sm:$0xff]
        %v500 = vld [vmem:[#allocation3 + $0xf0] sm:$0xff]
        %v501 = vld [vmem:[#allocation3 + $0xf8] sm:$0xff]
        %v534 = vunpack.c.l.b16 %v438
        %v535 = vunpack.c.h.b16 %v438
        %v536 = vunpack.c.l.b16 %v439
        %v537 = vunpack.c.h.b16 %v439
        %v538 = vunpack.c.l.b16 %v440
        %v539 = vunpack.c.h.b16 %v440
        %v540 = vunpack.c.l.b16 %v441
        %v541 = vunpack.c.h.b16 %v441
        %v542 = vunpack.c.l.b16 %v442
        %v543 = vunpack.c.h.b16 %v442
        %v544 = vunpack.c.l.b16 %v443
        %v545 = vunpack.c.h.b16 %v443
        %v546 = vunpack.c.l.b16 %v444
        %v547 = vunpack.c.h.b16 %v444
        %v548 = vunpack.c.l.b16 %v445
        %v549 = vunpack.c.h.b16 %v445
        %v550 = vunpack.c.l.b16 %v446
        %v551 = vunpack.c.h.b16 %v446
        %v552 = vunpack.c.l.b16 %v447
        %v553 = vunpack.c.h.b16 %v447
        %v554 = vunpack.c.l.b16 %v448
        %v555 = vunpack.c.h.b16 %v448
        %v556 = vunpack.c.l.b16 %v449
        %v557 = vunpack.c.h.b16 %v449
        %v558 = vunpack.c.l.b16 %v450
        %v559 = vunpack.c.h.b16 %v450
        %v560 = vunpack.c.l.b16 %v451
        %v561 = vunpack.c.h.b16 %v451
        %v562 = vunpack.c.l.b16 %v452
        %v563 = vunpack.c.h.b16 %v452
        %v564 = vunpack.c.l.b16 %v453
        %v565 = vunpack.c.h.b16 %v453
        %v566 = vunpack.c.l.b16 %v454
        %v567 = vunpack.c.h.b16 %v454
        %v568 = vunpack.c.l.b16 %v455
        %v569 = vunpack.c.h.b16 %v455
        %v570 = vunpack.c.l.b16 %v456
        %v571 = vunpack.c.h.b16 %v456
        %v572 = vunpack.c.l.b16 %v457
        %v573 = vunpack.c.h.b16 %v457
        %v574 = vunpack.c.l.b16 %v458
        %v575 = vunpack.c.h.b16 %v458
        %v576 = vunpack.c.l.b16 %v459
        %v577 = vunpack.c.h.b16 %v459
        %v578 = vunpack.c.l.b16 %v460
        %v579 = vunpack.c.h.b16 %v460
        %v580 = vunpack.c.l.b16 %v461
        %v581 = vunpack.c.h.b16 %v461
        %v582 = vunpack.c.l.b16 %v462
        %v583 = vunpack.c.h.b16 %v462
        %v584 = vunpack.c.l.b16 %v463
        %v585 = vunpack.c.h.b16 %v463
        %v586 = vunpack.c.l.b16 %v464
        %v587 = vunpack.c.h.b16 %v464
        %v588 = vunpack.c.l.b16 %v465
        %v589 = vunpack.c.h.b16 %v465
        %v590 = vunpack.c.l.b16 %v466
        %v591 = vunpack.c.h.b16 %v466
        %v592 = vunpack.c.l.b16 %v467
        %v593 = vunpack.c.h.b16 %v467
        %v594 = vunpack.c.l.b16 %v468
        %v595 = vunpack.c.h.b16 %v468
        %v596 = vunpack.c.l.b16 %v469
        %v597 = vunpack.c.h.b16 %v469
        %v598 = vpack.c.b16 %v536, %v534
        %v599 = vpack.c.b16 %v537, %v535
        %v600 = vpack.c.b16 %v540, %v538
        %v601 = vpack.c.b16 %v541, %v539
        %v602 = vpack.c.b16 %v544, %v542
        %v603 = vpack.c.b16 %v545, %v543
        %v604 = vpack.c.b16 %v548, %v546
        %v605 = vpack.c.b16 %v549, %v547
        %v606 = vpack.c.b16 %v552, %v550
        %v607 = vpack.c.b16 %v553, %v551
        %v608 = vpack.c.b16 %v556, %v554
        %v609 = vpack.c.b16 %v557, %v555
        %v610 = vpack.c.b16 %v560, %v558
        %v611 = vpack.c.b16 %v561, %v559
        %v612 = vpack.c.b16 %v564, %v562
        %v613 = vpack.c.b16 %v565, %v563
        %v614 = vpack.c.b16 %v568, %v566
        %v615 = vpack.c.b16 %v569, %v567
        %v616 = vpack.c.b16 %v572, %v570
        %v617 = vpack.c.b16 %v573, %v571
        %v618 = vpack.c.b16 %v576, %v574
        %v619 = vpack.c.b16 %v577, %v575
        %v620 = vpack.c.b16 %v580, %v578
        %v621 = vpack.c.b16 %v581, %v579
        %v622 = vpack.c.b16 %v584, %v582
        %v623 = vpack.c.b16 %v585, %v583
        %v624 = vpack.c.b16 %v588, %v586
        %v625 = vpack.c.b16 %v589, %v587
        %v626 = vpack.c.b16 %v592, %v590
        %v627 = vpack.c.b16 %v593, %v591
        %v628 = vpack.c.b16 %v596, %v594
        %v629 = vpack.c.b16 %v597, %v595
        %v694 = vunpack.c.l.b16 %v400
        %v695 = vunpack.c.l.b16 %v401
        %v696 = vunpack.c.l.b16 %v402
        %v697 = vunpack.c.l.b16 %v403
        %v698 = vunpack.c.l.b16 %v404
        %v699 = vunpack.c.l.b16 %v405
        %v700 = vunpack.c.l.b16 %v406
        %v701 = vunpack.c.l.b16 %v407
        %v702 = vunpack.c.l.b16 %v408
        %v703 = vunpack.c.l.b16 %v409
        %v704 = vunpack.c.l.b16 %v410
        %v705 = vunpack.c.l.b16 %v411
        %v706 = vunpack.c.l.b16 %v412
        %v707 = vunpack.c.l.b16 %v413
        %v708 = vunpack.c.l.b16 %v414
        %v709 = vunpack.c.l.b16 %v415
        %v710 = vunpack.c.l.b16 %v416
        %v711 = vunpack.c.l.b16 %v417
        %v712 = vunpack.c.l.b16 %v418
        %v713 = vunpack.c.l.b16 %v419
        %v714 = vunpack.c.l.b16 %v420
        %v715 = vunpack.c.l.b16 %v421
        %v716 = vunpack.c.l.b16 %v422
        %v717 = vunpack.c.l.b16 %v423
        %v718 = vunpack.c.l.b16 %v424
        %v719 = vunpack.c.l.b16 %v425
        %v720 = vunpack.c.l.b16 %v426
        %v721 = vunpack.c.l.b16 %v427
        %v722 = vunpack.c.l.b16 %v428
        %v723 = vunpack.c.l.b16 %v429
        %v724 = vunpack.c.l.b16 %v430
        %v725 = vunpack.c.l.b16 %v431
        %v726 = vpack.c.b16 %v695, %v694
        %v727 = vpack.c.b16 %v697, %v696
        %v728 = vpack.c.b16 %v699, %v698
        %v729 = vpack.c.b16 %v701, %v700
        %v730 = vpack.c.b16 %v703, %v702
        %v731 = vpack.c.b16 %v705, %v704
        %v732 = vpack.c.b16 %v707, %v706
        %v733 = vpack.c.b16 %v709, %v708
        %v734 = vpack.c.b16 %v711, %v710
        %v735 = vpack.c.b16 %v713, %v712
        %v736 = vpack.c.b16 %v715, %v714
        %v737 = vpack.c.b16 %v717, %v716
        %v738 = vpack.c.b16 %v719, %v718
        %v739 = vpack.c.b16 %v721, %v720
        %v740 = vpack.c.b16 %v723, %v722
        %v741 = vpack.c.b16 %v725, %v724
        %758 = vmatprep.subr.bf16.mxu0 0
        %759 = vmatpush1.bf16.msra.mxu0 %v733
        %760 = vmatprep.subr.bf16.mxu0 0
        %761 = vmatpush1.bf16.msra.mxu0 %v732
        %762 = vmatprep.subr.bf16.mxu0 0
        %763 = vmatpush1.bf16.msra.mxu0 %v731
        %764 = vmatprep.subr.bf16.mxu0 0
        %765 = vmatpush1.bf16.msra.mxu0 %v730
        %766 = vmatprep.subr.bf16.mxu0 0
        %767 = vmatpush1.bf16.msra.mxu0 %v729
        %768 = vmatprep.subr.bf16.mxu0 0
        %769 = vmatpush1.bf16.msra.mxu0 %v728
        %770 = vmatprep.subr.bf16.mxu0 0
        %771 = vmatpush1.bf16.msra.mxu0 %v727
        %772 = vmatprep.subr.bf16.mxu0 0
        %773 = vmatpush1.bf16.msra.mxu0 %v726
        %774 = vmatprep.subr.bf16.mxu0 0
        %775 = vmatpush2.bf16.msra.mxu0 %v741
        %776 = vmatprep.subr.bf16.mxu0 0
        %777 = vmatpush2.bf16.msra.mxu0 %v740
        %778 = vmatprep.subr.bf16.mxu0 0
        %779 = vmatpush2.bf16.msra.mxu0 %v739
        %780 = vmatprep.subr.bf16.mxu0 0
        %781 = vmatpush2.bf16.msra.mxu0 %v738
        %782 = vmatprep.subr.bf16.mxu0 0
        %783 = vmatpush2.bf16.msra.mxu0 %v737
        %784 = vmatprep.subr.bf16.mxu0 0
        %785 = vmatpush2.bf16.msra.mxu0 %v736
        %786 = vmatprep.subr.bf16.mxu0 0
        %787 = vmatpush2.bf16.msra.mxu0 %v735
        %788 = vmatprep.subr.bf16.mxu0 0
        %789 = vmatpush2.bf16.msra.mxu0 %v734
        %790 = vmatprep.mubr.bf16.mxu0 %v599
        %791 = vmatmul.mubr.bf16.gmra.mxu0 %v598
        %v792 = vpop.f32.mrf.mxu0
        %v793 = vadd.f32 0.0, %v792
        %v794 = vpop.f32.mrf.mxu0
        %v795 = vpop.f32.mrf.mxu0
        %v796 = vadd.f32 0.0, %v795
        %v797 = vpop.f32.mrf.mxu0
        %798 = vmatprep.mubr.bf16.mxu0 %v601
        %799 = vmatmul.mubr.bf16.gmra.mxu0 %v600
        %v800 = vpop.f32.mrf.mxu0
        %v801 = vadd.f32 0.0, %v800
        %v802 = vpop.f32.mrf.mxu0
        %v803 = vpop.f32.mrf.mxu0
        %v804 = vadd.f32 0.0, %v803
        %v805 = vpop.f32.mrf.mxu0
        %806 = vmatprep.mubr.bf16.mxu0 %v603
        %807 = vmatmul.mubr.bf16.gmra.mxu0 %v602
        %v808 = vpop.f32.mrf.mxu0
        %v809 = vadd.f32 0.0, %v808
        %v810 = vpop.f32.mrf.mxu0
        %v811 = vpop.f32.mrf.mxu0
        %v812 = vadd.f32 0.0, %v811
        %v813 = vpop.f32.mrf.mxu0
        %814 = vmatprep.mubr.bf16.mxu0 %v605
        %815 = vmatmul.mubr.bf16.gmra.mxu0 %v604
        %v816 = vpop.f32.mrf.mxu0
        %v817 = vadd.f32 0.0, %v816
        %v818 = vpop.f32.mrf.mxu0
        %v819 = vpop.f32.mrf.mxu0
        %v820 = vadd.f32 0.0, %v819
        %v821 = vpop.f32.mrf.mxu0
        %822 = vmatprep.mubr.bf16.mxu0 %v607
        %823 = vmatmul.mubr.bf16.gmra.mxu0 %v606
        %v824 = vpop.f32.mrf.mxu0
        %v825 = vadd.f32 0.0, %v824
        %v826 = vpop.f32.mrf.mxu0
        %v827 = vpop.f32.mrf.mxu0
        %v828 = vadd.f32 0.0, %v827
        %v829 = vpop.f32.mrf.mxu0
        %830 = vmatprep.mubr.bf16.mxu0 %v609
        %831 = vmatmul.mubr.bf16.gmra.mxu0 %v608
        %v832 = vpop.f32.mrf.mxu0
        %v833 = vadd.f32 0.0, %v832
        %v834 = vpop.f32.mrf.mxu0
        %v835 = vpop.f32.mrf.mxu0
        %v836 = vadd.f32 0.0, %v835
        %v837 = vpop.f32.mrf.mxu0
        %838 = vmatprep.mubr.bf16.mxu0 %v611
        %839 = vmatmul.mubr.bf16.gmra.mxu0 %v610
        %v840 = vpop.f32.mrf.mxu0
        %v841 = vadd.f32 0.0, %v840
        %v842 = vpop.f32.mrf.mxu0
        %v843 = vpop.f32.mrf.mxu0
        %v844 = vadd.f32 0.0, %v843
        %v845 = vpop.f32.mrf.mxu0
        %846 = vmatprep.mubr.bf16.mxu0 %v613
        %847 = vmatmul.mubr.bf16.gmra.mxu0 %v612
        %v848 = vpop.f32.mrf.mxu0
        %v849 = vadd.f32 0.0, %v848
        %v850 = vpop.f32.mrf.mxu0
        %v851 = vpop.f32.mrf.mxu0
        %v852 = vadd.f32 0.0, %v851
        %v853 = vpop.f32.mrf.mxu0
        %854 = vmatprep.mubr.bf16.mxu0 %v615
        %855 = vmatmul.mubr.bf16.gmra.mxu0 %v614
        %v856 = vpop.f32.mrf.mxu0
        %v857 = vadd.f32 0.0, %v856
        %v858 = vpop.f32.mrf.mxu0
        %v859 = vpop.f32.mrf.mxu0
        %v860 = vadd.f32 0.0, %v859
        %v861 = vpop.f32.mrf.mxu0
        %862 = vmatprep.mubr.bf16.mxu0 %v617
        %863 = vmatmul.mubr.bf16.gmra.mxu0 %v616
        %v864 = vpop.f32.mrf.mxu0
        %v865 = vadd.f32 0.0, %v864
        %v866 = vpop.f32.mrf.mxu0
        %v867 = vpop.f32.mrf.mxu0
        %v868 = vadd.f32 0.0, %v867
        %v869 = vpop.f32.mrf.mxu0
        %870 = vmatprep.mubr.bf16.mxu0 %v619
        %871 = vmatmul.mubr.bf16.gmra.mxu0 %v618
        %v872 = vpop.f32.mrf.mxu0
        %v873 = vadd.f32 0.0, %v872
        %v874 = vpop.f32.mrf.mxu0
        %v875 = vpop.f32.mrf.mxu0
        %v876 = vadd.f32 0.0, %v875
        %v877 = vpop.f32.mrf.mxu0
        %878 = vmatprep.mubr.bf16.mxu0 %v621
        %879 = vmatmul.mubr.bf16.gmra.mxu0 %v620
        %v880 = vpop.f32.mrf.mxu0
        %v881 = vadd.f32 0.0, %v880
        %v882 = vpop.f32.mrf.mxu0
        %v883 = vpop.f32.mrf.mxu0
        %v884 = vadd.f32 0.0, %v883
        %v885 = vpop.f32.mrf.mxu0
        %886 = vmatprep.mubr.bf16.mxu0 %v623
        %887 = vmatmul.mubr.bf16.gmra.mxu0 %v622
        %v888 = vpop.f32.mrf.mxu0
        %v889 = vadd.f32 0.0, %v888
        %v890 = vpop.f32.mrf.mxu0
        %v891 = vpop.f32.mrf.mxu0
        %v892 = vadd.f32 0.0, %v891
        %v893 = vpop.f32.mrf.mxu0
        %894 = vmatprep.mubr.bf16.mxu0 %v625
        %895 = vmatmul.mubr.bf16.gmra.mxu0 %v624
        %v896 = vpop.f32.mrf.mxu0
        %v897 = vadd.f32 0.0, %v896
        %v898 = vpop.f32.mrf.mxu0
        %v899 = vpop.f32.mrf.mxu0
        %v900 = vadd.f32 0.0, %v899
        %v901 = vpop.f32.mrf.mxu0
        %902 = vmatprep.mubr.bf16.mxu0 %v627
        %903 = vmatmul.mubr.bf16.gmra.mxu0 %v626
        %v904 = vpop.f32.mrf.mxu0
        %v905 = vadd.f32 0.0, %v904
        %v906 = vpop.f32.mrf.mxu0
        %v907 = vpop.f32.mrf.mxu0
        %v908 = vadd.f32 0.0, %v907
        %v909 = vpop.f32.mrf.mxu0
        %910 = vmatprep.mubr.bf16.mxu0 %v629
        %911 = vmatmul.mubr.bf16.gmra.mxu0 %v628
        %v912 = vpop.f32.mrf.mxu0
        %v913 = vadd.f32 0.0, %v912
        %v914 = vpop.f32.mrf.mxu0
        %v915 = vpop.f32.mrf.mxu0
        %v916 = vadd.f32 0.0, %v915
        %v917 = vpop.f32.mrf.mxu0
        %918 = vdwg.mxu0
        %v919 = vadd.f32 %v470, %v793
        %v920 = vadd.f32 %v471, %v796
        %v921 = vadd.f32 %v472, %v801
        %v922 = vadd.f32 %v473, %v804
        %v923 = vadd.f32 %v474, %v809
        %v924 = vadd.f32 %v475, %v812
        %v925 = vadd.f32 %v476, %v817
        %v926 = vadd.f32 %v477, %v820
        %v927 = vadd.f32 %v478, %v825
        %v928 = vadd.f32 %v479, %v828
        %v929 = vadd.f32 %v480, %v833
        %v930 = vadd.f32 %v481, %v836
        %v931 = vadd.f32 %v482, %v841
        %v932 = vadd.f32 %v483, %v844
        %v933 = vadd.f32 %v484, %v849
        %v934 = vadd.f32 %v485, %v852
        %v935 = vadd.f32 %v486, %v857
        %v936 = vadd.f32 %v487, %v860
        %v937 = vadd.f32 %v488, %v865
        %v938 = vadd.f32 %v489, %v868
        %v939 = vadd.f32 %v490, %v873
        %v940 = vadd.f32 %v491, %v876
        %v941 = vadd.f32 %v492, %v881
        %v942 = vadd.f32 %v493, %v884
        %v943 = vadd.f32 %v494, %v889
        %v944 = vadd.f32 %v495, %v892
        %v945 = vadd.f32 %v496, %v897
        %v946 = vadd.f32 %v497, %v900
        %v947 = vadd.f32 %v498, %v905
        %v948 = vadd.f32 %v499, %v908
        %v949 = vadd.f32 %v500, %v913
        %v950 = vadd.f32 %v501, %v916
        %951 = vst [vmem:[#allocation3] sm:$0xff] %v919
        %952 = vst [vmem:[#allocation3 + $0x8] sm:$0xff] %v920
        %953 = vst [vmem:[#allocation3 + $0x10] sm:$0xff] %v921
        %954 = vst [vmem:[#allocation3 + $0x18] sm:$0xff] %v922
        %955 = vst [vmem:[#allocation3 + $0x20] sm:$0xff] %v923
        %956 = vst [vmem:[#allocation3 + $0x28] sm:$0xff] %v924
        %957 = vst [vmem:[#allocation3 + $0x30] sm:$0xff] %v925
        %958 = vst [vmem:[#allocation3 + $0x38] sm:$0xff] %v926
        %959 = vst [vmem:[#allocation3 + $0x40] sm:$0xff] %v927
        %960 = vst [vmem:[#allocation3 + $0x48] sm:$0xff] %v928
        %961 = vst [vmem:[#allocation3 + $0x50] sm:$0xff] %v929
        %962 = vst [vmem:[#allocation3 + $0x58] sm:$0xff] %v930
        %963 = vst [vmem:[#allocation3 + $0x60] sm:$0xff] %v931
        %964 = vst [vmem:[#allocation3 + $0x68] sm:$0xff] %v932
        %965 = vst [vmem:[#allocation3 + $0x70] sm:$0xff] %v933
        %966 = vst [vmem:[#allocation3 + $0x78] sm:$0xff] %v934
        %967 = vst [vmem:[#allocation3 + $0x80] sm:$0xff] %v935
        %968 = vst [vmem:[#allocation3 + $0x88] sm:$0xff] %v936
        %969 = vst [vmem:[#allocation3 + $0x90] sm:$0xff] %v937
        %970 = vst [vmem:[#allocation3 + $0x98] sm:$0xff] %v938
        %971 = vst [vmem:[#allocation3 + $0xa0] sm:$0xff] %v939
        %972 = vst [vmem:[#allocation3 + $0xa8] sm:$0xff] %v940
        %973 = vst [vmem:[#allocation3 + $0xb0] sm:$0xff] %v941
        %974 = vst [vmem:[#allocation3 + $0xb8] sm:$0xff] %v942
        %975 = vst [vmem:[#allocation3 + $0xc0] sm:$0xff] %v943
        %976 = vst [vmem:[#allocation3 + $0xc8] sm:$0xff] %v944
        %977 = vst [vmem:[#allocation3 + $0xd0] sm:$0xff] %v945
        %978 = vst [vmem:[#allocation3 + $0xd8] sm:$0xff] %v946
        %979 = vst [vmem:[#allocation3 + $0xe0] sm:$0xff] %v947
        %980 = vst [vmem:[#allocation3 + $0xe8] sm:$0xff] %v948
        %981 = vst [vmem:[#allocation3 + $0xf0] sm:$0xff] %v949
        %982 = vst [vmem:[#allocation3 + $0xf8] sm:$0xff] %v950
        // Predicated region
        $region61: #{tpu_custom_call.1} parent=35 // pred_check
          %p983 = pneg %p317
        $region62: #{tpu_custom_call.1} parent=35 // pred_check_branch
          %985 = sbr.rel (%p983) target = $region64
        $region63: #{tpu_custom_call.1} parent=35 // pred_region
          %v986 = vld [vmem:[#allocation3] sm:$0xff]
          %v987 = vld [vmem:[#allocation3 + $0x8] sm:$0xff]
          %v988 = vld [vmem:[#allocation3 + $0x10] sm:$0xff]
          %v989 = vld [vmem:[#allocation3 + $0x18] sm:$0xff]
          %v990 = vld [vmem:[#allocation3 + $0x20] sm:$0xff]
          %v991 = vld [vmem:[#allocation3 + $0x28] sm:$0xff]
          %v992 = vld [vmem:[#allocation3 + $0x30] sm:$0xff]
          %v993 = vld [vmem:[#allocation3 + $0x38] sm:$0xff]
          %v994 = vld [vmem:[#allocation3 + $0x40] sm:$0xff]
          %v995 = vld [vmem:[#allocation3 + $0x48] sm:$0xff]
          %v996 = vld [vmem:[#allocation3 + $0x50] sm:$0xff]
          %v997 = vld [vmem:[#allocation3 + $0x58] sm:$0xff]
          %v998 = vld [vmem:[#allocation3 + $0x60] sm:$0xff]
          %v999 = vld [vmem:[#allocation3 + $0x68] sm:$0xff]
          %v1000 = vld [vmem:[#allocation3 + $0x70] sm:$0xff]
          %v1001 = vld [vmem:[#allocation3 + $0x78] sm:$0xff]
          %v1002 = vld [vmem:[#allocation3 + $0x80] sm:$0xff]
          %v1003 = vld [vmem:[#allocation3 + $0x88] sm:$0xff]
          %v1004 = vld [vmem:[#allocation3 + $0x90] sm:$0xff]
          %v1005 = vld [vmem:[#allocation3 + $0x98] sm:$0xff]
          %v1006 = vld [vmem:[#allocation3 + $0xa0] sm:$0xff]
          %v1007 = vld [vmem:[#allocation3 + $0xa8] sm:$0xff]
          %v1008 = vld [vmem:[#allocation3 + $0xb0] sm:$0xff]
          %v1009 = vld [vmem:[#allocation3 + $0xb8] sm:$0xff]
          %v1010 = vld [vmem:[#allocation3 + $0xc0] sm:$0xff]
          %v1011 = vld [vmem:[#allocation3 + $0xc8] sm:$0xff]
          %v1012 = vld [vmem:[#allocation3 + $0xd0] sm:$0xff]
          %v1013 = vld [vmem:[#allocation3 + $0xd8] sm:$0xff]
          %v1014 = vld [vmem:[#allocation3 + $0xe0] sm:$0xff]
          %v1015 = vld [vmem:[#allocation3 + $0xe8] sm:$0xff]
          %v1016 = vld [vmem:[#allocation3 + $0xf0] sm:$0xff]
          %v1017 = vld [vmem:[#allocation3 + $0xf8] sm:$0xff]
          %v1018 = vpack.c.bf16 %v987, %v986
          %v1019 = vpack.c.bf16 %v989, %v988
          %v1020 = vpack.c.bf16 %v991, %v990
          %v1021 = vpack.c.bf16 %v993, %v992
          %v1022 = vpack.c.bf16 %v995, %v994
          %v1023 = vpack.c.bf16 %v997, %v996
          %v1024 = vpack.c.bf16 %v999, %v998
          %v1025 = vpack.c.bf16 %v1001, %v1000
          %v1026 = vpack.c.bf16 %v1003, %v1002
          %v1027 = vpack.c.bf16 %v1005, %v1004
          %v1028 = vpack.c.bf16 %v1007, %v1006
          %v1029 = vpack.c.bf16 %v1009, %v1008
          %v1030 = vpack.c.bf16 %v1011, %v1010
          %v1031 = vpack.c.bf16 %v1013, %v1012
          %v1032 = vpack.c.bf16 %v1015, %v1014
          %v1033 = vpack.c.bf16 %v1017, %v1016
          %v1034 = vld [vmem:[%s258] sm:$0xf]
          %v1035 = vld [vmem:[%s258 + $0x4] sm:$0xf]
          %v1036 = vld [vmem:[%s258 + $0x8] sm:$0xf]
          %v1037 = vld [vmem:[%s258 + $0xc] sm:$0xf]
          %v1038 = vld [vmem:[%s258 + $0x10] sm:$0xf]
          %v1039 = vld [vmem:[%s258 + $0x14] sm:$0xf]
          %v1040 = vld [vmem:[%s258 + $0x18] sm:$0xf]
          %v1041 = vld [vmem:[%s258 + $0x1c] sm:$0xf]
          %v1042 = vld [vmem:[%s258 + $0x20] sm:$0xf]
          %v1043 = vld [vmem:[%s258 + $0x24] sm:$0xf]
          %v1044 = vld [vmem:[%s258 + $0x28] sm:$0xf]
          %v1045 = vld [vmem:[%s258 + $0x2c] sm:$0xf]
          %v1046 = vld [vmem:[%s258 + $0x30] sm:$0xf]
          %v1047 = vld [vmem:[%s258 + $0x34] sm:$0xf]
          %v1048 = vld [vmem:[%s258 + $0x38] sm:$0xf]
          %v1049 = vld [vmem:[%s258 + $0x3c] sm:$0xf]
          %v1050 = vld [vmem:[%s305] sm:$0x1]
          %v1052 = vlaneseq
          %v1053 = vshrl.u32 %v1052, 7
          %v1054 = vsub.s32 0, %v1053
          %v1055 = vrot.slane %v1050, %v1054
          %v1073 = vunpack.c.l.b16 %v1034
          %v1074 = vunpack.c.l.b16 %v1035
          %v1075 = vunpack.c.l.b16 %v1036
          %v1076 = vunpack.c.l.b16 %v1037
          %v1077 = vunpack.c.l.b16 %v1038
          %v1078 = vunpack.c.l.b16 %v1039
          %v1079 = vunpack.c.l.b16 %v1040
          %v1080 = vunpack.c.l.b16 %v1041
          %v1081 = vunpack.c.l.b16 %v1042
          %v1082 = vunpack.c.l.b16 %v1043
          %v1083 = vunpack.c.l.b16 %v1044
          %v1084 = vunpack.c.l.b16 %v1045
          %v1085 = vunpack.c.l.b16 %v1046
          %v1086 = vunpack.c.l.b16 %v1047
          %v1087 = vunpack.c.l.b16 %v1048
          %v1088 = vunpack.c.l.b16 %v1049
          %v1089 = vpack.c.b16 %v1074, %v1073
          %v1090 = vpack.c.b16 %v1076, %v1075
          %v1091 = vpack.c.b16 %v1078, %v1077
          %v1092 = vpack.c.b16 %v1080, %v1079
          %v1093 = vpack.c.b16 %v1082, %v1081
          %v1094 = vpack.c.b16 %v1084, %v1083
          %v1095 = vpack.c.b16 %v1086, %v1085
          %v1096 = vpack.c.b16 %v1088, %v1087
          %1105 = vmatprep.subr.bf16.mxu0 0
          %1106 = vmatpush1.bf16.msra.mxu0 %v1096
          %1107 = vmatprep.subr.bf16.mxu0 0
          %1108 = vmatpush1.bf16.msra.mxu0 %v1095
          %1109 = vmatprep.subr.bf16.mxu0 0
          %1110 = vmatpush1.bf16.msra.mxu0 %v1094
          %1111 = vmatprep.subr.bf16.mxu0 0
          %1112 = vmatpush1.bf16.msra.mxu0 %v1093
          %1113 = vmatprep.subr.bf16.mxu0 0
          %1114 = vmatpush1.bf16.msra.mxu0 %v1092
          %1115 = vmatprep.subr.bf16.mxu0 0
          %1116 = vmatpush1.bf16.msra.mxu0 %v1091
          %1117 = vmatprep.subr.bf16.mxu0 0
          %1118 = vmatpush1.bf16.msra.mxu0 %v1090
          %1119 = vmatprep.subr.bf16.mxu0 0
          %1120 = vmatpush1.bf16.msra.mxu0 %v1089
          %1121 = vmatprep.subr.bf16.mxu0 0
          %1122 = vmatpush2.bf16.msra.mxu0 0
          %1123 = vmatprep.subr.bf16.mxu0 0
          %1124 = vmatpush2.bf16.msra.mxu0 0
          %1125 = vmatprep.subr.bf16.mxu0 0
          %1126 = vmatpush2.bf16.msra.mxu0 0
          %1127 = vmatprep.subr.bf16.mxu0 0
          %1128 = vmatpush2.bf16.msra.mxu0 0
          %1129 = vmatprep.subr.bf16.mxu0 0
          %1130 = vmatpush2.bf16.msra.mxu0 0
          %1131 = vmatprep.subr.bf16.mxu0 0
          %1132 = vmatpush2.bf16.msra.mxu0 0
          %1133 = vmatprep.subr.bf16.mxu0 0
          %1134 = vmatpush2.bf16.msra.mxu0 0
          %1135 = vmatprep.subr.bf16.mxu0 0
          %1136 = vmatpush2.bf16.msra.mxu0 0
          %1137 = vmatprep.mubr.bf16.mxu0 0
          %1138 = vmatmul.mubr.bf16.gmra.mxu0 %v1018
          %v1139 = vpop.f32.mrf.mxu0
          %v1140 = vadd.f32 %v1055, %v1139
          %v1141 = vpop.f32.mrf.mxu0
          %v1142 = vpop.f32.mrf.mxu0
          %v1143 = vadd.f32 %v1055, %v1142
          %v1144 = vpop.f32.mrf.mxu0
          %1145 = vmatprep.mubr.bf16.mxu0 0
          %1146 = vmatmul.mubr.bf16.gmra.mxu0 %v1019
          %v1147 = vpop.f32.mrf.mxu0
          %v1148 = vadd.f32 %v1055, %v1147
          %v1149 = vpop.f32.mrf.mxu0
          %v1150 = vpop.f32.mrf.mxu0
          %v1151 = vadd.f32 %v1055, %v1150
          %v1152 = vpop.f32.mrf.mxu0
          %1153 = vmatprep.mubr.bf16.mxu0 0
          %1154 = vmatmul.mubr.bf16.gmra.mxu0 %v1020
          %v1155 = vpop.f32.mrf.mxu0
          %v1156 = vadd.f32 %v1055, %v1155
          %v1157 = vpop.f32.mrf.mxu0
          %v1158 = vpop.f32.mrf.mxu0
          %v1159 = vadd.f32 %v1055, %v1158
          %v1160 = vpop.f32.mrf.mxu0
          %1161 = vmatprep.mubr.bf16.mxu0 0
          %1162 = vmatmul.mubr.bf16.gmra.mxu0 %v1021
          %v1163 = vpop.f32.mrf.mxu0
          %v1164 = vadd.f32 %v1055, %v1163
          %v1165 = vpop.f32.mrf.mxu0
          %v1166 = vpop.f32.mrf.mxu0
          %v1167 = vadd.f32 %v1055, %v1166
          %v1168 = vpop.f32.mrf.mxu0
          %1169 = vmatprep.mubr.bf16.mxu0 0
          %1170 = vmatmul.mubr.bf16.gmra.mxu0 %v1022
          %v1171 = vpop.f32.mrf.mxu0
          %v1172 = vadd.f32 %v1055, %v1171
          %v1173 = vpop.f32.mrf.mxu0
          %v1174 = vpop.f32.mrf.mxu0
          %v1175 = vadd.f32 %v1055, %v1174
          %v1176 = vpop.f32.mrf.mxu0
          %1177 = vmatprep.mubr.bf16.mxu0 0
          %1178 = vmatmul.mubr.bf16.gmra.mxu0 %v1023
          %v1179 = vpop.f32.mrf.mxu0
          %v1180 = vadd.f32 %v1055, %v1179
          %v1181 = vpop.f32.mrf.mxu0
          %v1182 = vpop.f32.mrf.mxu0
          %v1183 = vadd.f32 %v1055, %v1182
          %v1184 = vpop.f32.mrf.mxu0
          %1185 = vmatprep.mubr.bf16.mxu0 0
          %1186 = vmatmul.mubr.bf16.gmra.mxu0 %v1024
          %v1187 = vpop.f32.mrf.mxu0
          %v1188 = vadd.f32 %v1055, %v1187
          %v1189 = vpop.f32.mrf.mxu0
          %v1190 = vpop.f32.mrf.mxu0
          %v1191 = vadd.f32 %v1055, %v1190
          %v1192 = vpop.f32.mrf.mxu0
          %1193 = vmatprep.mubr.bf16.mxu0 0
          %1194 = vmatmul.mubr.bf16.gmra.mxu0 %v1025
          %v1195 = vpop.f32.mrf.mxu0
          %v1196 = vadd.f32 %v1055, %v1195
          %v1197 = vpop.f32.mrf.mxu0
          %v1198 = vpop.f32.mrf.mxu0
          %v1199 = vadd.f32 %v1055, %v1198
          %v1200 = vpop.f32.mrf.mxu0
          %1201 = vmatprep.mubr.bf16.mxu0 0
          %1202 = vmatmul.mubr.bf16.gmra.mxu0 %v1026
          %v1203 = vpop.f32.mrf.mxu0
          %v1204 = vadd.f32 %v1055, %v1203
          %v1205 = vpop.f32.mrf.mxu0
          %v1206 = vpop.f32.mrf.mxu0
          %v1207 = vadd.f32 %v1055, %v1206
          %v1208 = vpop.f32.mrf.mxu0
          %1209 = vmatprep.mubr.bf16.mxu0 0
          %1210 = vmatmul.mubr.bf16.gmra.mxu0 %v1027
          %v1211 = vpop.f32.mrf.mxu0
          %v1212 = vadd.f32 %v1055, %v1211
          %v1213 = vpop.f32.mrf.mxu0
          %v1214 = vpop.f32.mrf.mxu0
          %v1215 = vadd.f32 %v1055, %v1214
          %v1216 = vpop.f32.mrf.mxu0
          %1217 = vmatprep.mubr.bf16.mxu0 0
          %1218 = vmatmul.mubr.bf16.gmra.mxu0 %v1028
          %v1219 = vpop.f32.mrf.mxu0
          %v1220 = vadd.f32 %v1055, %v1219
          %v1221 = vpop.f32.mrf.mxu0
          %v1222 = vpop.f32.mrf.mxu0
          %v1223 = vadd.f32 %v1055, %v1222
          %v1224 = vpop.f32.mrf.mxu0
          %1225 = vmatprep.mubr.bf16.mxu0 0
          %1226 = vmatmul.mubr.bf16.gmra.mxu0 %v1029
          %v1227 = vpop.f32.mrf.mxu0
          %v1228 = vadd.f32 %v1055, %v1227
          %v1229 = vpop.f32.mrf.mxu0
          %v1230 = vpop.f32.mrf.mxu0
          %v1231 = vadd.f32 %v1055, %v1230
          %v1232 = vpop.f32.mrf.mxu0
          %1233 = vmatprep.mubr.bf16.mxu0 0
          %1234 = vmatmul.mubr.bf16.gmra.mxu0 %v1030
          %v1235 = vpop.f32.mrf.mxu0
          %v1236 = vadd.f32 %v1055, %v1235
          %v1237 = vpop.f32.mrf.mxu0
          %v1238 = vpop.f32.mrf.mxu0
          %v1239 = vadd.f32 %v1055, %v1238
          %v1240 = vpop.f32.mrf.mxu0
          %1241 = vmatprep.mubr.bf16.mxu0 0
          %1242 = vmatmul.mubr.bf16.gmra.mxu0 %v1031
          %v1243 = vpop.f32.mrf.mxu0
          %v1244 = vadd.f32 %v1055, %v1243
          %v1245 = vpop.f32.mrf.mxu0
          %v1246 = vpop.f32.mrf.mxu0
          %v1247 = vadd.f32 %v1055, %v1246
          %v1248 = vpop.f32.mrf.mxu0
          %1249 = vmatprep.mubr.bf16.mxu0 0
          %1250 = vmatmul.mubr.bf16.gmra.mxu0 %v1032
          %v1251 = vpop.f32.mrf.mxu0
          %v1252 = vadd.f32 %v1055, %v1251
          %v1253 = vpop.f32.mrf.mxu0
          %v1254 = vpop.f32.mrf.mxu0
          %v1255 = vadd.f32 %v1055, %v1254
          %v1256 = vpop.f32.mrf.mxu0
          %1257 = vmatprep.mubr.bf16.mxu0 0
          %1258 = vmatmul.mubr.bf16.gmra.mxu0 %v1033
          %v1259 = vpop.f32.mrf.mxu0
          %v1260 = vadd.f32 %v1055, %v1259
          %v1261 = vpop.f32.mrf.mxu0
          %v1262 = vpop.f32.mrf.mxu0
          %v1263 = vadd.f32 %v1055, %v1262
          %v1264 = vpop.f32.mrf.mxu0
          %1265 = vdwg.mxu0
          %v1266 = vmax.f32 %v1140, 0.0
          %v1267 = vmax.f32 %v1143, 0.0
          %v1268 = vmax.f32 %v1148, 0.0
          %v1269 = vmax.f32 %v1151, 0.0
          %v1270 = vmax.f32 %v1156, 0.0
          %v1271 = vmax.f32 %v1159, 0.0
          %v1272 = vmax.f32 %v1164, 0.0
          %v1273 = vmax.f32 %v1167, 0.0
          %v1274 = vmax.f32 %v1172, 0.0
          %v1275 = vmax.f32 %v1175, 0.0
          %v1276 = vmax.f32 %v1180, 0.0
          %v1277 = vmax.f32 %v1183, 0.0
          %v1278 = vmax.f32 %v1188, 0.0
          %v1279 = vmax.f32 %v1191, 0.0
          %v1280 = vmax.f32 %v1196, 0.0
          %v1281 = vmax.f32 %v1199, 0.0
          %v1282 = vmax.f32 %v1204, 0.0
          %v1283 = vmax.f32 %v1207, 0.0
          %v1284 = vmax.f32 %v1212, 0.0
          %v1285 = vmax.f32 %v1215, 0.0
          %v1286 = vmax.f32 %v1220, 0.0
          %v1287 = vmax.f32 %v1223, 0.0
          %v1288 = vmax.f32 %v1228, 0.0
          %v1289 = vmax.f32 %v1231, 0.0
          %v1290 = vmax.f32 %v1236, 0.0
          %v1291 = vmax.f32 %v1239, 0.0
          %v1292 = vmax.f32 %v1244, 0.0
          %v1293 = vmax.f32 %v1247, 0.0
          %v1294 = vmax.f32 %v1252, 0.0
          %v1295 = vmax.f32 %v1255, 0.0
          %v1296 = vmax.f32 %v1260, 0.0
          %v1297 = vmax.f32 %v1263, 0.0
          %v1298 = vpack.c.bf16 %v1267, %v1266
          %v1299 = vpack.c.bf16 %v1269, %v1268
          %v1300 = vpack.c.bf16 %v1271, %v1270
          %v1301 = vpack.c.bf16 %v1273, %v1272
          %v1302 = vpack.c.bf16 %v1275, %v1274
          %v1303 = vpack.c.bf16 %v1277, %v1276
          %v1304 = vpack.c.bf16 %v1279, %v1278
          %v1305 = vpack.c.bf16 %v1281, %v1280
          %v1306 = vpack.c.bf16 %v1283, %v1282
          %v1307 = vpack.c.bf16 %v1285, %v1284
          %v1308 = vpack.c.bf16 %v1287, %v1286
          %v1309 = vpack.c.bf16 %v1289, %v1288
          %v1310 = vpack.c.bf16 %v1291, %v1290
          %v1311 = vpack.c.bf16 %v1293, %v1292
          %v1312 = vpack.c.bf16 %v1295, %v1294
          %v1313 = vpack.c.bf16 %v1297, %v1296
          %v1314 = vld [vmem:[%s267] sm:$0xf]
          %v1315 = vld [vmem:[%s267 + $0x4] sm:$0xf]
          %v1316 = vld [vmem:[%s267 + $0x8] sm:$0xf]
          %v1317 = vld [vmem:[%s267 + $0xc] sm:$0xf]
          %v1318 = vld [vmem:[%s267 + $0x10] sm:$0xf]
          %v1319 = vld [vmem:[%s267 + $0x14] sm:$0xf]
          %v1320 = vld [vmem:[%s267 + $0x18] sm:$0xf]
          %v1321 = vld [vmem:[%s267 + $0x1c] sm:$0xf]
          %v1322 = vld [vmem:[%s267 + $0x20] sm:$0xf]
          %v1323 = vld [vmem:[%s267 + $0x24] sm:$0xf]
          %v1324 = vld [vmem:[%s267 + $0x28] sm:$0xf]
          %v1325 = vld [vmem:[%s267 + $0x2c] sm:$0xf]
          %v1326 = vld [vmem:[%s267 + $0x30] sm:$0xf]
          %v1327 = vld [vmem:[%s267 + $0x34] sm:$0xf]
          %v1328 = vld [vmem:[%s267 + $0x38] sm:$0xf]
          %v1329 = vld [vmem:[%s267 + $0x3c] sm:$0xf]
          %v1330 = vld [vmem:[%s308] sm:$0x1]
          %v1332 = vlaneseq
          %v1333 = vshrl.u32 %v1332, 7
          %v1334 = vsub.s32 0, %v1333
          %v1335 = vrot.slane %v1330, %v1334
          %v1353 = vunpack.c.l.b16 %v1314
          %v1354 = vunpack.c.l.b16 %v1315
          %v1355 = vunpack.c.l.b16 %v1316
          %v1356 = vunpack.c.l.b16 %v1317
          %v1357 = vunpack.c.l.b16 %v1318
          %v1358 = vunpack.c.l.b16 %v1319
          %v1359 = vunpack.c.l.b16 %v1320
          %v1360 = vunpack.c.l.b16 %v1321
          %v1361 = vunpack.c.l.b16 %v1322
          %v1362 = vunpack.c.l.b16 %v1323
          %v1363 = vunpack.c.l.b16 %v1324
          %v1364 = vunpack.c.l.b16 %v1325
          %v1365 = vunpack.c.l.b16 %v1326
          %v1366 = vunpack.c.l.b16 %v1327
          %v1367 = vunpack.c.l.b16 %v1328
          %v1368 = vunpack.c.l.b16 %v1329
          %v1369 = vpack.c.b16 %v1354, %v1353
          %v1370 = vpack.c.b16 %v1356, %v1355
          %v1371 = vpack.c.b16 %v1358, %v1357
          %v1372 = vpack.c.b16 %v1360, %v1359
          %v1373 = vpack.c.b16 %v1362, %v1361
          %v1374 = vpack.c.b16 %v1364, %v1363
          %v1375 = vpack.c.b16 %v1366, %v1365
          %v1376 = vpack.c.b16 %v1368, %v1367
          %1385 = vmatprep.subr.bf16.mxu0 0
          %1386 = vmatpush1.bf16.msra.mxu0 %v1376
          %1387 = vmatprep.subr.bf16.mxu0 0
          %1388 = vmatpush1.bf16.msra.mxu0 %v1375
          %1389 = vmatprep.subr.bf16.mxu0 0
          %1390 = vmatpush1.bf16.msra.mxu0 %v1374
          %1391 = vmatprep.subr.bf16.mxu0 0
          %1392 = vmatpush1.bf16.msra.mxu0 %v1373
          %1393 = vmatprep.subr.bf16.mxu0 0
          %1394 = vmatpush1.bf16.msra.mxu0 %v1372
          %1395 = vmatprep.subr.bf16.mxu0 0
          %1396 = vmatpush1.bf16.msra.mxu0 %v1371
          %1397 = vmatprep.subr.bf16.mxu0 0
          %1398 = vmatpush1.bf16.msra.mxu0 %v1370
          %1399 = vmatprep.subr.bf16.mxu0 0
          %1400 = vmatpush1.bf16.msra.mxu0 %v1369
          %1401 = vmatprep.subr.bf16.mxu0 0
          %1402 = vmatpush2.bf16.msra.mxu0 0
          %1403 = vmatprep.subr.bf16.mxu0 0
          %1404 = vmatpush2.bf16.msra.mxu0 0
          %1405 = vmatprep.subr.bf16.mxu0 0
          %1406 = vmatpush2.bf16.msra.mxu0 0
          %1407 = vmatprep.subr.bf16.mxu0 0
          %1408 = vmatpush2.bf16.msra.mxu0 0
          %1409 = vmatprep.subr.bf16.mxu0 0
          %1410 = vmatpush2.bf16.msra.mxu0 0
          %1411 = vmatprep.subr.bf16.mxu0 0
          %1412 = vmatpush2.bf16.msra.mxu0 0
          %1413 = vmatprep.subr.bf16.mxu0 0
          %1414 = vmatpush2.bf16.msra.mxu0 0
          %1415 = vmatprep.subr.bf16.mxu0 0
          %1416 = vmatpush2.bf16.msra.mxu0 0
          %1417 = vmatprep.mubr.bf16.mxu0 0
          %1418 = vmatmul.mubr.bf16.gmra.mxu0 %v1298
          %v1419 = vpop.f32.mrf.mxu0
          %v1420 = vadd.f32 %v1335, %v1419
          %v1421 = vpop.f32.mrf.mxu0
          %v1422 = vpop.f32.mrf.mxu0
          %v1423 = vadd.f32 %v1335, %v1422
          %v1424 = vpop.f32.mrf.mxu0
          %1425 = vmatprep.mubr.bf16.mxu0 0
          %1426 = vmatmul.mubr.bf16.gmra.mxu0 %v1299
          %v1427 = vpop.f32.mrf.mxu0
          %v1428 = vadd.f32 %v1335, %v1427
          %v1429 = vpop.f32.mrf.mxu0
          %v1430 = vpop.f32.mrf.mxu0
          %v1431 = vadd.f32 %v1335, %v1430
          %v1432 = vpop.f32.mrf.mxu0
          %1433 = vmatprep.mubr.bf16.mxu0 0
          %1434 = vmatmul.mubr.bf16.gmra.mxu0 %v1300
          %v1435 = vpop.f32.mrf.mxu0
          %v1436 = vadd.f32 %v1335, %v1435
          %v1437 = vpop.f32.mrf.mxu0
          %v1438 = vpop.f32.mrf.mxu0
          %v1439 = vadd.f32 %v1335, %v1438
          %v1440 = vpop.f32.mrf.mxu0
          %1441 = vmatprep.mubr.bf16.mxu0 0
          %1442 = vmatmul.mubr.bf16.gmra.mxu0 %v1301
          %v1443 = vpop.f32.mrf.mxu0
          %v1444 = vadd.f32 %v1335, %v1443
          %v1445 = vpop.f32.mrf.mxu0
          %v1446 = vpop.f32.mrf.mxu0
          %v1447 = vadd.f32 %v1335, %v1446
          %v1448 = vpop.f32.mrf.mxu0
          %1449 = vmatprep.mubr.bf16.mxu0 0
          %1450 = vmatmul.mubr.bf16.gmra.mxu0 %v1302
          %v1451 = vpop.f32.mrf.mxu0
          %v1452 = vadd.f32 %v1335, %v1451
          %v1453 = vpop.f32.mrf.mxu0
          %v1454 = vpop.f32.mrf.mxu0
          %v1455 = vadd.f32 %v1335, %v1454
          %v1456 = vpop.f32.mrf.mxu0
          %1457 = vmatprep.mubr.bf16.mxu0 0
          %1458 = vmatmul.mubr.bf16.gmra.mxu0 %v1303
          %v1459 = vpop.f32.mrf.mxu0
          %v1460 = vadd.f32 %v1335, %v1459
          %v1461 = vpop.f32.mrf.mxu0
          %v1462 = vpop.f32.mrf.mxu0
          %v1463 = vadd.f32 %v1335, %v1462
          %v1464 = vpop.f32.mrf.mxu0
          %1465 = vmatprep.mubr.bf16.mxu0 0
          %1466 = vmatmul.mubr.bf16.gmra.mxu0 %v1304
          %v1467 = vpop.f32.mrf.mxu0
          %v1468 = vadd.f32 %v1335, %v1467
          %v1469 = vpop.f32.mrf.mxu0
          %v1470 = vpop.f32.mrf.mxu0
          %v1471 = vadd.f32 %v1335, %v1470
          %v1472 = vpop.f32.mrf.mxu0
          %1473 = vmatprep.mubr.bf16.mxu0 0
          %1474 = vmatmul.mubr.bf16.gmra.mxu0 %v1305
          %v1475 = vpop.f32.mrf.mxu0
          %v1476 = vadd.f32 %v1335, %v1475
          %v1477 = vpop.f32.mrf.mxu0
          %v1478 = vpop.f32.mrf.mxu0
          %v1479 = vadd.f32 %v1335, %v1478
          %v1480 = vpop.f32.mrf.mxu0
          %1481 = vmatprep.mubr.bf16.mxu0 0
          %1482 = vmatmul.mubr.bf16.gmra.mxu0 %v1306
          %v1483 = vpop.f32.mrf.mxu0
          %v1484 = vadd.f32 %v1335, %v1483
          %v1485 = vpop.f32.mrf.mxu0
          %v1486 = vpop.f32.mrf.mxu0
          %v1487 = vadd.f32 %v1335, %v1486
          %v1488 = vpop.f32.mrf.mxu0
          %1489 = vmatprep.mubr.bf16.mxu0 0
          %1490 = vmatmul.mubr.bf16.gmra.mxu0 %v1307
          %v1491 = vpop.f32.mrf.mxu0
          %v1492 = vadd.f32 %v1335, %v1491
          %v1493 = vpop.f32.mrf.mxu0
          %v1494 = vpop.f32.mrf.mxu0
          %v1495 = vadd.f32 %v1335, %v1494
          %v1496 = vpop.f32.mrf.mxu0
          %1497 = vmatprep.mubr.bf16.mxu0 0
          %1498 = vmatmul.mubr.bf16.gmra.mxu0 %v1308
          %v1499 = vpop.f32.mrf.mxu0
          %v1500 = vadd.f32 %v1335, %v1499
          %v1501 = vpop.f32.mrf.mxu0
          %v1502 = vpop.f32.mrf.mxu0
          %v1503 = vadd.f32 %v1335, %v1502
          %v1504 = vpop.f32.mrf.mxu0
          %1505 = vmatprep.mubr.bf16.mxu0 0
          %1506 = vmatmul.mubr.bf16.gmra.mxu0 %v1309
          %v1507 = vpop.f32.mrf.mxu0
          %v1508 = vadd.f32 %v1335, %v1507
          %v1509 = vpop.f32.mrf.mxu0
          %v1510 = vpop.f32.mrf.mxu0
          %v1511 = vadd.f32 %v1335, %v1510
          %v1512 = vpop.f32.mrf.mxu0
          %1513 = vmatprep.mubr.bf16.mxu0 0
          %1514 = vmatmul.mubr.bf16.gmra.mxu0 %v1310
          %v1515 = vpop.f32.mrf.mxu0
          %v1516 = vadd.f32 %v1335, %v1515
          %v1517 = vpop.f32.mrf.mxu0
          %v1518 = vpop.f32.mrf.mxu0
          %v1519 = vadd.f32 %v1335, %v1518
          %v1520 = vpop.f32.mrf.mxu0
          %1521 = vmatprep.mubr.bf16.mxu0 0
          %1522 = vmatmul.mubr.bf16.gmra.mxu0 %v1311
          %v1523 = vpop.f32.mrf.mxu0
          %v1524 = vadd.f32 %v1335, %v1523
          %v1525 = vpop.f32.mrf.mxu0
          %v1526 = vpop.f32.mrf.mxu0
          %v1527 = vadd.f32 %v1335, %v1526
          %v1528 = vpop.f32.mrf.mxu0
          %1529 = vmatprep.mubr.bf16.mxu0 0
          %1530 = vmatmul.mubr.bf16.gmra.mxu0 %v1312
          %v1531 = vpop.f32.mrf.mxu0
          %v1532 = vadd.f32 %v1335, %v1531
          %v1533 = vpop.f32.mrf.mxu0
          %v1534 = vpop.f32.mrf.mxu0
          %v1535 = vadd.f32 %v1335, %v1534
          %v1536 = vpop.f32.mrf.mxu0
          %1537 = vmatprep.mubr.bf16.mxu0 0
          %1538 = vmatmul.mubr.bf16.gmra.mxu0 %v1313
          %v1539 = vpop.f32.mrf.mxu0
          %v1540 = vadd.f32 %v1335, %v1539
          %v1541 = vpop.f32.mrf.mxu0
          %v1542 = vpop.f32.mrf.mxu0
          %v1543 = vadd.f32 %v1335, %v1542
          %v1544 = vpop.f32.mrf.mxu0
          %1545 = vdwg.mxu0
          %v1546 = vmax.f32 %v1420, 0.0
          %v1547 = vmax.f32 %v1423, 0.0
          %v1548 = vmax.f32 %v1428, 0.0
          %v1549 = vmax.f32 %v1431, 0.0
          %v1550 = vmax.f32 %v1436, 0.0
          %v1551 = vmax.f32 %v1439, 0.0
          %v1552 = vmax.f32 %v1444, 0.0
          %v1553 = vmax.f32 %v1447, 0.0
          %v1554 = vmax.f32 %v1452, 0.0
          %v1555 = vmax.f32 %v1455, 0.0
          %v1556 = vmax.f32 %v1460, 0.0
          %v1557 = vmax.f32 %v1463, 0.0
          %v1558 = vmax.f32 %v1468, 0.0
          %v1559 = vmax.f32 %v1471, 0.0
          %v1560 = vmax.f32 %v1476, 0.0
          %v1561 = vmax.f32 %v1479, 0.0
          %v1562 = vmax.f32 %v1484, 0.0
          %v1563 = vmax.f32 %v1487, 0.0
          %v1564 = vmax.f32 %v1492, 0.0
          %v1565 = vmax.f32 %v1495, 0.0
          %v1566 = vmax.f32 %v1500, 0.0
          %v1567 = vmax.f32 %v1503, 0.0
          %v1568 = vmax.f32 %v1508, 0.0
          %v1569 = vmax.f32 %v1511, 0.0
          %v1570 = vmax.f32 %v1516, 0.0
          %v1571 = vmax.f32 %v1519, 0.0
          %v1572 = vmax.f32 %v1524, 0.0
          %v1573 = vmax.f32 %v1527, 0.0
          %v1574 = vmax.f32 %v1532, 0.0
          %v1575 = vmax.f32 %v1535, 0.0
          %v1576 = vmax.f32 %v1540, 0.0
          %v1577 = vmax.f32 %v1543, 0.0
          %s1578 = ssub.s32 1, %s392
          %v1579 = vpack.c.bf16 %v1547, %v1546
          %v1580 = vpack.c.bf16 %v1549, %v1548
          %v1581 = vpack.c.bf16 %v1551, %v1550
          %v1582 = vpack.c.bf16 %v1553, %v1552
          %v1583 = vpack.c.bf16 %v1555, %v1554
          %v1584 = vpack.c.bf16 %v1557, %v1556
          %v1585 = vpack.c.bf16 %v1559, %v1558
          %v1586 = vpack.c.bf16 %v1561, %v1560
          %v1587 = vpack.c.bf16 %v1563, %v1562
          %v1588 = vpack.c.bf16 %v1565, %v1564
          %v1589 = vpack.c.bf16 %v1567, %v1566
          %v1590 = vpack.c.bf16 %v1569, %v1568
          %v1591 = vpack.c.bf16 %v1571, %v1570
          %v1592 = vpack.c.bf16 %v1573, %v1572
          %v1593 = vpack.c.bf16 %v1575, %v1574
          %v1594 = vpack.c.bf16 %v1577, %v1576
          %v1611 = vunpack.c.l.b16 %v1579
          %v1612 = vunpack.c.h.b16 %v1579
          %v1613 = vunpack.c.l.b16 %v1580
          %v1614 = vunpack.c.h.b16 %v1580
          %v1615 = vunpack.c.l.b16 %v1581
          %v1616 = vunpack.c.h.b16 %v1581
          %v1617 = vunpack.c.l.b16 %v1582
          %v1618 = vunpack.c.h.b16 %v1582
          %v1619 = vunpack.c.l.b16 %v1583
          %v1620 = vunpack.c.h.b16 %v1583
          %v1621 = vunpack.c.l.b16 %v1584
          %v1622 = vunpack.c.h.b16 %v1584
          %v1623 = vunpack.c.l.b16 %v1585
          %v1624 = vunpack.c.h.b16 %v1585
          %v1625 = vunpack.c.l.b16 %v1586
          %v1626 = vunpack.c.h.b16 %v1586
          %v1627 = vunpack.c.l.b16 %v1587
          %v1628 = vunpack.c.h.b16 %v1587
          %v1629 = vunpack.c.l.b16 %v1588
          %v1630 = vunpack.c.h.b16 %v1588
          %v1631 = vunpack.c.l.b16 %v1589
          %v1632 = vunpack.c.h.b16 %v1589
          %v1633 = vunpack.c.l.b16 %v1590
          %v1634 = vunpack.c.h.b16 %v1590
          %v1635 = vunpack.c.l.b16 %v1591
          %v1636 = vunpack.c.h.b16 %v1591
          %v1637 = vunpack.c.l.b16 %v1592
          %v1638 = vunpack.c.h.b16 %v1592
          %v1639 = vunpack.c.l.b16 %v1593
          %v1640 = vunpack.c.h.b16 %v1593
          %v1641 = vunpack.c.l.b16 %v1594
          %v1642 = vunpack.c.h.b16 %v1594
          %v1643 = vpack.c.b16 %v1611, %v1611
          %v1644 = vpack.c.b16 %v1612, %v1612
          %v1645 = vpack.c.b16 %v1613, %v1613
          %v1646 = vpack.c.b16 %v1614, %v1614
          %v1647 = vpack.c.b16 %v1615, %v1615
          %v1648 = vpack.c.b16 %v1616, %v1616
          %v1649 = vpack.c.b16 %v1617, %v1617
          %v1650 = vpack.c.b16 %v1618, %v1618
          %v1651 = vpack.c.b16 %v1619, %v1619
          %v1652 = vpack.c.b16 %v1620, %v1620
          %v1653 = vpack.c.b16 %v1621, %v1621
          %v1654 = vpack.c.b16 %v1622, %v1622
          %v1655 = vpack.c.b16 %v1623, %v1623
          %v1656 = vpack.c.b16 %v1624, %v1624
          %v1657 = vpack.c.b16 %v1625, %v1625
          %v1658 = vpack.c.b16 %v1626, %v1626
          %v1659 = vpack.c.b16 %v1627, %v1627
          %v1660 = vpack.c.b16 %v1628, %v1628
          %v1661 = vpack.c.b16 %v1629, %v1629
          %v1662 = vpack.c.b16 %v1630, %v1630
          %v1663 = vpack.c.b16 %v1631, %v1631
          %v1664 = vpack.c.b16 %v1632, %v1632
          %v1665 = vpack.c.b16 %v1633, %v1633
          %v1666 = vpack.c.b16 %v1634, %v1634
          %v1667 = vpack.c.b16 %v1635, %v1635
          %v1668 = vpack.c.b16 %v1636, %v1636
          %v1669 = vpack.c.b16 %v1637, %v1637
          %v1670 = vpack.c.b16 %v1638, %v1638
          %v1671 = vpack.c.b16 %v1639, %v1639
          %v1672 = vpack.c.b16 %v1640, %v1640
          %v1673 = vpack.c.b16 %v1641, %v1641
          %v1674 = vpack.c.b16 %v1642, %v1642
          %s1707 = smul.u32 %s1578, 32
          %s1708 = sadd.s32 %s433, %s1707
          %s1709 = smul.addr %s1708, 4
          %s1710 = scalar_lea.vmem [#allocation2], %s1709
          %1711 = vst [vmem:[%s1710] sm:$0xf] %v1643
          %1712 = vst [vmem:[%s1710 + $0x4] sm:$0xf] %v1644
          %1713 = vst [vmem:[%s1710 + $0x8] sm:$0xf] %v1645
          %1714 = vst [vmem:[%s1710 + $0xc] sm:$0xf] %v1646
          %1715 = vst [vmem:[%s1710 + $0x10] sm:$0xf] %v1647
          %1716 = vst [vmem:[%s1710 + $0x14] sm:$0xf] %v1648
          %1717 = vst [vmem:[%s1710 + $0x18] sm:$0xf] %v1649
          %1718 = vst [vmem:[%s1710 + $0x1c] sm:$0xf] %v1650
          %1719 = vst [vmem:[%s1710 + $0x20] sm:$0xf] %v1651
          %1720 = vst [vmem:[%s1710 + $0x24] sm:$0xf] %v1652
          %1721 = vst [vmem:[%s1710 + $0x28] sm:$0xf] %v1653
          %1722 = vst [vmem:[%s1710 + $0x2c] sm:$0xf] %v1654
          %1723 = vst [vmem:[%s1710 + $0x30] sm:$0xf] %v1655
          %1724 = vst [vmem:[%s1710 + $0x34] sm:$0xf] %v1656
          %1725 = vst [vmem:[%s1710 + $0x38] sm:$0xf] %v1657
          %1726 = vst [vmem:[%s1710 + $0x3c] sm:$0xf] %v1658
          %1727 = vst [vmem:[%s1710 + $0x40] sm:$0xf] %v1659
          %1728 = vst [vmem:[%s1710 + $0x44] sm:$0xf] %v1660
          %1729 = vst [vmem:[%s1710 + $0x48] sm:$0xf] %v1661
          %1730 = vst [vmem:[%s1710 + $0x4c] sm:$0xf] %v1662
          %1731 = vst [vmem:[%s1710 + $0x50] sm:$0xf] %v1663
          %1732 = vst [vmem:[%s1710 + $0x54] sm:$0xf] %v1664
          %1733 = vst [vmem:[%s1710 + $0x58] sm:$0xf] %v1665
          %1734 = vst [vmem:[%s1710 + $0x5c] sm:$0xf] %v1666
          %1735 = vst [vmem:[%s1710 + $0x60] sm:$0xf] %v1667
          %1736 = vst [vmem:[%s1710 + $0x64] sm:$0xf] %v1668
          %1737 = vst [vmem:[%s1710 + $0x68] sm:$0xf] %v1669
          %1738 = vst [vmem:[%s1710 + $0x6c] sm:$0xf] %v1670
          %1739 = vst [vmem:[%s1710 + $0x70] sm:$0xf] %v1671
          %1740 = vst [vmem:[%s1710 + $0x74] sm:$0xf] %v1672
          %1741 = vst [vmem:[%s1710 + $0x78] sm:$0xf] %v1673
          %1742 = vst [vmem:[%s1710 + $0x7c] sm:$0xf] %v1674
          %p1743 = scmp.eq.s32.totalorder %s31, 2
          // Predicated region
          $region65: #{tpu_custom_call.1} parent=63 // pred_check
            %p1744 = pneg %p1743
          $region66: #{tpu_custom_call.1} parent=63 // pred_check_branch
            %1746 = sbr.rel (%p1744) target = $region68
          $region67: #{tpu_custom_call.1} parent=63 // pred_region
            %1747 = vst [vmem:[%s302] sm:$0xff] %v1546
            %1748 = vst [vmem:[%s302 + $0x8] sm:$0xff] %v1547
            %1749 = vst [vmem:[%s302 + $0x10] sm:$0xff] %v1548
            %1750 = vst [vmem:[%s302 + $0x18] sm:$0xff] %v1549
            %1751 = vst [vmem:[%s302 + $0x20] sm:$0xff] %v1550
            %1752 = vst [vmem:[%s302 + $0x28] sm:$0xff] %v1551
            %1753 = vst [vmem:[%s302 + $0x30] sm:$0xff] %v1552
            %1754 = vst [vmem:[%s302 + $0x38] sm:$0xff] %v1553
            %1755 = vst [vmem:[%s302 + $0x40] sm:$0xff] %v1554
            %1756 = vst [vmem:[%s302 + $0x48] sm:$0xff] %v1555
            %1757 = vst [vmem:[%s302 + $0x50] sm:$0xff] %v1556
            %1758 = vst [vmem:[%s302 + $0x58] sm:$0xff] %v1557
            %1759 = vst [vmem:[%s302 + $0x60] sm:$0xff] %v1558
            %1760 = vst [vmem:[%s302 + $0x68] sm:$0xff] %v1559
            %1761 = vst [vmem:[%s302 + $0x70] sm:$0xff] %v1560
            %1762 = vst [vmem:[%s302 + $0x78] sm:$0xff] %v1561
            %1763 = vst [vmem:[%s302 + $0x80] sm:$0xff] %v1562
            %1764 = vst [vmem:[%s302 + $0x88] sm:$0xff] %v1563
            %1765 = vst [vmem:[%s302 + $0x90] sm:$0xff] %v1564
            %1766 = vst [vmem:[%s302 + $0x98] sm:$0xff] %v1565
            %1767 = vst [vmem:[%s302 + $0xa0] sm:$0xff] %v1566
            %1768 = vst [vmem:[%s302 + $0xa8] sm:$0xff] %v1567
            %1769 = vst [vmem:[%s302 + $0xb0] sm:$0xff] %v1568
            %1770 = vst [vmem:[%s302 + $0xb8] sm:$0xff] %v1569
            %1771 = vst [vmem:[%s302 + $0xc0] sm:$0xff] %v1570
            %1772 = vst [vmem:[%s302 + $0xc8] sm:$0xff] %v1571
            %1773 = vst [vmem:[%s302 + $0xd0] sm:$0xff] %v1572
            %1774 = vst [vmem:[%s302 + $0xd8] sm:$0xff] %v1573
            %1775 = vst [vmem:[%s302 + $0xe0] sm:$0xff] %v1574
            %1776 = vst [vmem:[%s302 + $0xe8] sm:$0xff] %v1575
            %1777 = vst [vmem:[%s302 + $0xf0] sm:$0xff] %v1576
            %1778 = vst [vmem:[%s302 + $0xf8] sm:$0xff] %v1577
          $region68: #{tpu_custom_call.1} parent=63 // pred_fallthru
            _
        $region64: #{tpu_custom_call.1} parent=35 // pred_fallthru
          _
        %s1779 = sand.u32 %s161, 1
        %s1780 = scalar_lea.sflag [#allocation8], %s1779
        %s1781 = sand.u32 %s161, 1
        %s1782 = smul.addr %s1781, 256
        %s1783 = scalar_lea.vmem [#allocation11], %s1782
        // Predicated region
        $region69: #{tpu_custom_call.1} parent=35 // pred_check
          %p1784 = pneg %p171
        $region70: #{tpu_custom_call.1} parent=35 // pred_check_branch
          %1786 = sbr.rel (%p1784) target = $region72
        $region71: #{tpu_custom_call.1} parent=35 // pred_region
          %p1787 = scmp.eq.s32.totalorder %s31, 2
          %s1788 = scalar_select %p1787, %s32, 0
          %s1789 = smul.u32 32, %s1788
          %s1791 = ssub.s32 4096, 4096
          %1792 = vsyncadd %s1780, %s1791
          %s1793 = smul.addr %s1789, 128
          %s1794 = scalar_lea.hbm %s6, %s1793
          %s1795 = sshll.u32 %s1783, 4
          %s1796 = int_to_ptr.vmem [resolvable:$true] %s1795
          %1801 = dma.vmem_to_hbm [thread:$0]  %s1796, 4096, %s1794, %s1780, 128, 128, 8
        $region72: #{tpu_custom_call.1} parent=35 // pred_fallthru
          _
      $region36: #{tpu_custom_call.1} parent=5 // pred_fallthru
        _
      %p1802 = scmp.le.s32.totalorder 2, %s21
      // Predicated region
      $region73: #{tpu_custom_call.1} parent=5 // pred_check
        %p1803 = pneg %p1802
      $region74: #{tpu_custom_call.1} parent=5 // pred_check_branch
        %1805 = sbr.rel (%p1803) target = $region76
      $region75: #{tpu_custom_call.1} parent=5 // pred_region
        %s1806 = ssub.s32 %s21, 2
        // Predicated region
        $region77: #{tpu_custom_call.1} parent=75 // pred_check
          %p1807 = pneg %p177
        $region78: #{tpu_custom_call.1} parent=75 // pred_check_branch
          %1809 = sbr.rel (%p1807) target = $region80
        $region79: #{tpu_custom_call.1} parent=75 // pred_region
          %s1810 = sand.u32 %s162, 1
          %s1811 = scalar_lea.sflag [#allocation8], %s1810
          %s1812 = sand.u32 %s162, 1
          %s1813 = smul.addr %s1812, 256
          %s1814 = scalar_lea.vmem [#allocation11], %s1813
          %1815 = dma.done %s1811, 4096
        $region80: #{tpu_custom_call.1} parent=75 // pred_fallthru
          _
      $region76: #{tpu_custom_call.1} parent=5 // pred_fallthru
        _
    $region6: #{tpu_custom_call.1} parent=1 // loop_footer
      %s25 = sadd.s32 1, %s21
    $region7: #{tpu_custom_call.1} parent=1 // loop_footer_branch
      %20 = sbr.rel target = $region3
    $region8: #{tpu_custom_call.1} parent=1 // loop_exit
      _
    %1816 = vsyncpa [#allocation7], 1
    %s1817 = scalar_lea.sflag [#allocation7], 1
    %1818 = vsyncpa %s1817, 1
    %1819 = vsyncpa [#allocation10], 1
    %s1820 = scalar_lea.sflag [#allocation10], 1
    %1821 = vsyncpa %s1820, 1
    %1822 = vsyncpa [#allocation8], 1
    %s1823 = scalar_lea.sflag [#allocation8], 1
    %1824 = vsyncpa %s1823, 1
  %1825 = vsyncmov [#allocation4]
  %s1826 = vpop.sfrf %1825
  %p1827 = scmp.eq.s32.totalorder %s1826, 0
  %p1828 = pneg %p1827
  %1830 = shalt.err (%p1828)
  %s1831 = scalar_lea.sflag [#allocation4], 1
  %1832 = vsyncmov %s1831
  %s1833 = vpop.sfrf %1832
  %p1834 = scmp.eq.s32.totalorder %s1833, 0
  %p1835 = pneg %p1834
  %1837 = shalt.err (%p1835)

</llo_original>
